<compile_context>
chip_gen: v6e
topology: v6e:2x2x1
jax: 0.10.0
libtpu: 0.0.40
codegen_flags: <defaults>
</compile_context>

<pallas_src>
import functools

import jax
import jax.numpy as jnp
from jax.experimental import pallas as pl
from jax.experimental.pallas import tpu as pltpu


def _log_sigmoid(x):
    # stable log(sigmoid(x)) = -softplus(-x)
    return -(jnp.maximum(-x, 0.0) + jnp.log1p(jnp.exp(-jnp.abs(x))))


# ----------------------------------------------------------------------------
# Fused kernel: one batch block per grid step.
#   cand   : [bB, M, Dt]  candidate entities (head for head-batch, tail for tail-batch)
#            column 0 = positive, columns 1.. = negatives
#   single : [bB, Dt]     the other (single-sample) entity
#   rel    : [bB, Dt]     relation (student branch)
#   orel   : [bB, Dt]     original relation (teacher branch)
#   drop   : [bB, Dt]     dropout-perturbed copy of the positive candidate
#   w      : [bB, 1]      subsampling weight (0 for padded rows)
#   ew/eb  : entity pruner  (Dt, Ds) / (1, Ds)   -- VMEM resident
#   rw/rb  : relation pruner(Dt, Ds) / (1, Ds)   -- VMEM resident
# Output: one (1, 8, 128) f32 tile of weighted partial sums
#   lanes [0..4] of row 0 = [sum w*pos_loss, sum w*neg_loss, sum w*mse,
#                            sum w*contrastive, sum w]
# ----------------------------------------------------------------------------
def _fused_kernel(cand_ref, single_ref, rel_ref, orel_ref, drop_ref, w_ref,
                  ew_ref, eb_ref, rw_ref, rb_ref, part_ref, *, inv_tau):
    f32 = jnp.float32
    bB, M, Dt = cand_ref.shape
    Ds = ew_ref.shape[1]
    n_neg = max(M - 1, 1)

    cand = cand_ref[...]                    # [bB, M, Dt] (compute dtype, e.g. bf16)
    single = single_ref[...]                # [bB, Dt]
    rel = rel_ref[...]
    orel = orel_ref[...]
    drop = drop_ref[...]
    w = w_ref[...].astype(f32)              # [bB, 1]

    # ---- teacher DistMult score on un-pruned embeddings: sum_d h*r*t --------
    # (DistMult is symmetric in head/tail, so head-batch / tail-batch share code)
    rt_t = orel.astype(f32) * single.astype(f32)                         # [bB, Dt]
    t_score = jnp.sum(cand.astype(f32) * rt_t[:, None, :], axis=-1)      # [bB, M]

    # ---- pruners (teacher dim -> student dim): bf16 MXU matmuls, f32 acc ----
    ew = ew_ref[...]
    rw = rw_ref[...]
    eb = eb_ref[...].astype(f32)                                         # [1, Ds]
    rb = rb_ref[...].astype(f32)

    cand2 = cand.reshape(bB * M, Dt)
    cand_s = (jnp.dot(cand2, ew, preferred_element_type=f32) + eb
              ).reshape(bB, M, Ds)                                       # [bB, M, Ds]
    single_s = jnp.dot(single, ew, preferred_element_type=f32) + eb      # [bB, Ds]
    rel_s = jnp.dot(rel, rw, preferred_element_type=f32) + rb            # [bB, Ds]
    drop_s = jnp.dot(drop, ew, preferred_element_type=f32) + eb          # [bB, Ds]

    # ---- student DistMult score over the M kept columns (== delete_s_score) -
    # (the dropped column's score is never used by any loss, so skip it)
    rt_s = rel_s * single_s                                              # [bB, Ds]
    s_del = jnp.sum(cand_s * rt_s[:, None, :], axis=-1)                  # [bB, M]

    lane = jax.lax.broadcasted_iota(jnp.int32, (bB, M), 1)
    is_pos = lane == 0

    # ---- main negative-sampling loss (positive = col 0, negatives = cols 1..)
    p_score = jnp.sum(jnp.where(is_pos, s_del, 0.0), axis=-1, keepdims=True)
    pos_loss = -_log_sigmoid(p_score)                                    # [bB, 1]
    neg_ls = jnp.where(is_pos, 0.0, _log_sigmoid(-s_del))
    neg_loss = -jnp.sum(neg_ls, axis=-1, keepdims=True) / float(n_neg)   # [bB, 1]

    # ---- KD loss: per-row MSE(t_score, delete_s_score) ----------------------
    mse = jnp.mean((t_score - s_del) ** 2, axis=-1, keepdims=True)       # [bB, 1]

    # ---- contrastive InfoNCE over pruned candidate embeddings ---------------
    # anchor = pruned positive (col 0), positive = pruned dropped copy,
    # negatives = pruned negative candidates (cols 1..).
    eps = 1e-6
    hn = cand_s * jax.lax.rsqrt(
        jnp.sum(cand_s * cand_s, axis=-1, keepdims=True) + eps)          # [bB, M, Ds]
    dn = drop_s * jax.lax.rsqrt(
        jnp.sum(drop_s * drop_s, axis=-1, keepdims=True) + eps)          # [bB, Ds]
    anchor = hn[:, 0:1, :]                                               # [bB, 1, Ds]
    sim_pos = jnp.sum(anchor * dn[:, None, :], axis=-1) * inv_tau        # [bB, 1]
    sims = jnp.sum(anchor * hn, axis=-1) * inv_tau                       # [bB, M]
    neg_mask = lane != 0
    m = jnp.maximum(
        sim_pos,
        jnp.max(jnp.where(neg_mask, sims, -1e30), axis=-1, keepdims=True))
    denom = (jnp.exp(sim_pos - m)
             + jnp.sum(jnp.where(neg_mask, jnp.exp(sims - m), 0.0),
                       axis=-1, keepdims=True))
    closs_per = -sim_pos + m + jnp.log(denom)                            # [bB, 1]

    # ---- weighted partial sums for this block (padded rows have w == 0) -----
    part_pos = jnp.sum(w * pos_loss)
    part_neg = jnp.sum(w * neg_loss)
    part_kd = jnp.sum(w * mse)
    part_cl = jnp.sum(w * closs_per)
    part_w = jnp.sum(w)

    l128 = jax.lax.broadcasted_iota(jnp.int32, (8, 128), 1)
    tile = (jnp.where(l128 == 0, part_pos, 0.0)
            + jnp.where(l128 == 1, part_neg, 0.0)
            + jnp.where(l128 == 2, part_kd, 0.0)
            + jnp.where(l128 == 3, part_cl, 0.0)
            + jnp.where(l128 == 4, part_w, 0.0))
    part_ref[...] = tile[None, :, :].astype(f32)


def _pick_block_b(batch, M, Dt, Ds, in_itemsize, budget_bytes=12 * 1024 * 1024):
    """Largest batch-block (multiple of 8, <=512) whose working set fits ~12MiB.

    Counts double-buffered input DMA blocks plus the in-kernel f32 intermediates,
    so the same choice is safe on v7x (64 MiB physical / 32 MiB scoped VMEM).
    """
    per_row = (2 * (M + 4) * Dt * in_itemsize   # double-buffered input blocks
               + M * Dt * 4                     # f32 upcast of the candidate block
               + 3 * M * Ds * 4                 # pruned + normalized student embs
               + 12 * M * 4)                    # score / similarity temporaries
    bb = (budget_bytes // max(per_row, 1)) // 8 * 8
    bb = max(8, min(512, bb))
    bb = min(bb, ((batch + 7) // 8) * 8)        # don't exceed (padded) batch
    return int(max(bb, 8))


# ----------------------------------------------------------------------------
# Forward pass (mirrors ContrastiveKDModel.forward)
# ----------------------------------------------------------------------------
def contrastive_kd_forward(head, relation, tail, origin_relation,
                           subsampling_weight, mode, params, args, drop_key,
                           training=True, block_b=None):
    if mode == 'head-batch':
        cand, other = head, tail
    elif mode == 'tail-batch':
        cand, other = tail, head
    else:
        raise ValueError(f"unknown mode: {mode}")
    if other.shape[1] != 1 or relation.shape[1] != 1 or origin_relation.shape[1] != 1:
        raise ValueError("non-candidate entity / relations must have exactly 1 sample")

    B, M, Dt = cand.shape
    Ds = params['ent_w'].shape[1]

    single = other[:, 0, :]                     # [B, Dt]
    rel2 = relation[:, 0, :]
    orel2 = origin_relation[:, 0, :]

    # make_contrastive_pair: dropout a copy of the positive candidate.  Instead of
    # concatenating it into a [B, M+1, Dt] tensor (an extra full HBM round trip of
    # the largest tensor), pass it to the fused kernel as a separate [B, Dt] input.
    p_drop = float(args['ckdloss_dropout'])
    first = cand[:, 0, :]
    if training and p_drop > 0.0:
        keep = jax.random.bernoulli(drop_key, 1.0 - p_drop, first.shape)
        dropped = jnp.where(keep, first / (1.0 - p_drop), 0.0).astype(cand.dtype)
    else:
        dropped = first
    # TODO(synk): the PyTorch module constructs nn.Dropout inside forward (always
    # train-mode); `training` adds the usual train/eval switch on top.

    w = subsampling_weight.reshape(B, 1).astype(jnp.float32)

    bB = block_b or _pick_block_b(B, M, Dt, Ds, jnp.dtype(cand.dtype).itemsize)
    nb = -(-B // bB)
    Bp = nb * bB
    if Bp != B:
        pad = Bp - B
        cand = jnp.pad(cand, ((0, pad), (0, 0), (0, 0)))
        single = jnp.pad(single, ((0, pad), (0, 0)))
        rel2 = jnp.pad(rel2, ((0, pad), (0, 0)))
        orel2 = jnp.pad(orel2, ((0, pad), (0, 0)))
        dropped = jnp.pad(dropped, ((0, pad), (0, 0)))
        w = jnp.pad(w, ((0, pad), (0, 0)))      # padded rows get weight 0

    ent_w = params['ent_w']
    rel_w = params['rel_w']
    ent_b = params['ent_b'].reshape(1, Ds).astype(jnp.float32)
    rel_b = params['rel_b'].reshape(1, Ds).astype(jnp.float32)

    kern = functools.partial(_fused_kernel, inv_tau=1.0 / float(args['tau']))

    grid_spec = pltpu.PrefetchScalarGridSpec(
        num_scalar_prefetch=0,
        grid=(nb,),
        in_specs=[
            pl.BlockSpec((bB, M, Dt), lambda i: (i, 0, 0)),   # candidate entities
            pl.BlockSpec((bB, Dt), lambda i: (i, 0)),         # other entity
            pl.BlockSpec((bB, Dt), lambda i: (i, 0)),         # relation
            pl.BlockSpec((bB, Dt), lambda i: (i, 0)),         # origin relation
            pl.BlockSpec((bB, Dt), lambda i: (i, 0)),         # dropped positive
            pl.BlockSpec((bB, 1), lambda i: (i, 0)),          # subsampling weight
            pl.BlockSpec((Dt, Ds), lambda i: (0, 0)),         # entity pruner W (resident)
            pl.BlockSpec((1, Ds), lambda i: (0, 0)),          # entity pruner b
            pl.BlockSpec((Dt, Ds), lambda i: (0, 0)),         # relation pruner W
            pl.BlockSpec((1, Ds), lambda i: (0, 0)),          # relation pruner b
        ],
        out_specs=pl.BlockSpec((1, 8, 128), lambda i: (i, 0, 0)),
    )

    partials = pl.pallas_call(
        kern,
        out_shape=jax.ShapeDtypeStruct((nb, 8, 128), jnp.float32),
        grid_spec=grid_spec,
        compiler_params=pltpu.CompilerParams(
            dimension_semantics=("parallel",)),
    )(cand, single, rel2, orel2, dropped, w, ent_w, ent_b, rel_w, rel_b)

    # tiny host-side finalize: reduce per-block partial sums to scalar losses
    p = jnp.sum(partials, axis=0)[0]            # (128,) f32
    sum_pos, sum_neg, sum_kd, sum_cl, sum_w = p[0], p[1], p[2], p[3], p[4]
    main = (sum_pos + sum_neg) / (2.0 * sum_w)
    kd = sum_kd / sum_w
    closs = sum_cl / sum_w
    total = (main
             + float(args['kdloss_weight']) * kd
             + float(args['ckdloss_weight']) * closs)

    # TODO(synk): loss_record.update(...)/.item() bookkeeping is host-side glue.
    loss_record = {
        'positive_negative_loss': main,
        'kd_loss': kd,
        'contrastive_loss': closs,
        'total_loss': total,
    }
    return total, loss_record


# ----------------------------------------------------------------------------
if __name__ == "__main__":
    key = jax.random.PRNGKey(0)
    B, M, Dt, Ds = 2, 8, 32, 16          # M = 1 positive + 7 negatives
    num_ent, num_rel = 20, 5
    ks = jax.random.split(key, 10)

    # synthetic EmbeddingManager: bf16 teacher tables + lookups, head-batch mode
    ent_table = (jax.random.normal(ks[0], (num_ent, Dt), jnp.float32) * 0.1
                 ).astype(jnp.bfloat16)
    rel_table = (jax.random.normal(ks[1], (num_rel, Dt), jnp.float32) * 0.1
                 ).astype(jnp.bfloat16)

    pos_head = jax.random.randint(ks[2], (B,), 0, num_ent)
    pos_rel = jax.random.randint(ks[3], (B,), 0, num_rel)
    pos_tail = jax.random.randint(ks[4], (B,), 0, num_ent)
    neg_heads = jax.random.randint(ks[5], (B, M - 1), 0, num_ent)
    head_ids = jnp.concatenate([pos_head[:, None], neg_heads], axis=1)    # [B, M]

    head = ent_table[head_ids]                    # [B, M, Dt]
    tail = ent_table[pos_tail][:, None, :]        # [B, 1, Dt]
    relation = rel_table[pos_rel][:, None, :]     # [B, 1, Dt]
    origin_relation = relation                    # teacher relation

    subsampling_weight = jax.random.uniform(ks[6], (B,), jnp.float32, 0.5, 1.5)

    params = {
        'ent_w': (jax.random.normal(ks[7], (Dt, Ds), jnp.float32)
                  / jnp.sqrt(Dt)).astype(jnp.bfloat16),
        'ent_b': jnp.zeros((Ds,), jnp.float32),
        'rel_w': (jax.random.normal(ks[8], (Dt, Ds), jnp.float32)
                  / jnp.sqrt(Dt)).astype(jnp.bfloat16),
        'rel_b': jnp.zeros((Ds,), jnp.float32),
    }
    args = {'kdloss_weight': 0.5, 'ckdloss_weight': 0.1,
            'ckdloss_dropout': 0.1, 'tau': 0.5}

    total, record = contrastive_kd_forward(
        head, relation, tail, origin_relation,
        subsampling_weight, 'head-batch', params, args, ks[9])
    jax.block_until_ready(total)
    print("KERNEL_OK")
</pallas_src>

<mosaic_0001>
module attributes {stable_mosaic.version = 11 : i64} {
  func.func @_fused_kernel(%arg0: i32, %arg1: memref<8x8x32xbf16, #tpu.memory_space<vmem>>, %arg2: memref<8x32xbf16, #tpu.memory_space<vmem>>, %arg3: memref<8x32xbf16, #tpu.memory_space<vmem>>, %arg4: memref<8x32xbf16, #tpu.memory_space<vmem>>, %arg5: memref<8x32xbf16, #tpu.memory_space<vmem>>, %arg6: memref<8x1xf32, #tpu.memory_space<vmem>>, %arg7: memref<32x16xbf16, #tpu.memory_space<vmem>>, %arg8: memref<1x16xf32, #tpu.memory_space<vmem>>, %arg9: memref<32x16xbf16, #tpu.memory_space<vmem>>, %arg10: memref<1x16xf32, #tpu.memory_space<vmem>>, %arg11: memref<1x8x128xf32, #tpu.memory_space<vmem>>) attributes {dimension_semantics = [#tpu.dimension_semantics<parallel>], iteration_bounds = array<i64: 1>, scalar_prefetch = 0 : i64, scratch_operands = 0 : i64, tpu.core_type = #tpu.core_type<tc>, window_params = [{transform_indices = @transform_0, window_bounds = array<i64: 8, 8, 32>}, {transform_indices = @transform_1, window_bounds = array<i64: 8, 32>}, {transform_indices = @transform_2, window_bounds = array<i64: 8, 32>}, {transform_indices = @transform_3, window_bounds = array<i64: 8, 32>}, {transform_indices = @transform_4, window_bounds = array<i64: 8, 32>}, {transform_indices = @transform_5, window_bounds = array<i64: 8, 1>}, {pipeline_mode = #tpu.pipeline_mode<synchronous>, transform_indices = @transform_6, window_bounds = array<i64: 32, 16>}, {pipeline_mode = #tpu.pipeline_mode<synchronous>, transform_indices = @transform_7, window_bounds = array<i64: 1, 16>}, {pipeline_mode = #tpu.pipeline_mode<synchronous>, transform_indices = @transform_8, window_bounds = array<i64: 32, 16>}, {pipeline_mode = #tpu.pipeline_mode<synchronous>, transform_indices = @transform_9, window_bounds = array<i64: 1, 16>}, {transform_indices = @transform_10, window_bounds = array<i64: 1, 8, 128>}]} {
    %c0 = arith.constant 0 : index
    %c0_0 = arith.constant 0 : index
    %c0_1 = arith.constant 0 : index
    %0 = vector.load %arg1[%c0, %c0_0, %c0_1] : memref<8x8x32xbf16, #tpu.memory_space<vmem>>, vector<8x8x32xbf16>
    %c0_2 = arith.constant 0 : index
    %c0_3 = arith.constant 0 : index
    %1 = vector.load %arg2[%c0_2, %c0_3] : memref<8x32xbf16, #tpu.memory_space<vmem>>, vector<8x32xbf16>
    %c0_4 = arith.constant 0 : index
    %c0_5 = arith.constant 0 : index
    %2 = vector.load %arg3[%c0_4, %c0_5] : memref<8x32xbf16, #tpu.memory_space<vmem>>, vector<8x32xbf16>
    %c0_6 = arith.constant 0 : index
    %c0_7 = arith.constant 0 : index
    %3 = vector.load %arg4[%c0_6, %c0_7] : memref<8x32xbf16, #tpu.memory_space<vmem>>, vector<8x32xbf16>
    %c0_8 = arith.constant 0 : index
    %c0_9 = arith.constant 0 : index
    %4 = vector.load %arg5[%c0_8, %c0_9] : memref<8x32xbf16, #tpu.memory_space<vmem>>, vector<8x32xbf16>
    %c0_10 = arith.constant 0 : index
    %c0_11 = arith.constant 0 : index
    %5 = vector.load %arg6[%c0_10, %c0_11] : memref<8x1xf32, #tpu.memory_space<vmem>>, vector<8x1xf32>
    %6 = arith.extf %3 : vector<8x32xbf16> to vector<8x32xf32>
    %7 = arith.extf %1 : vector<8x32xbf16> to vector<8x32xf32>
    %8 = arith.mulf %6, %7 : vector<8x32xf32>
    %9 = arith.extf %0 : vector<8x8x32xbf16> to vector<8x8x32xf32>
    %10 = vector.shape_cast %8 : vector<8x32xf32> to vector<8x1x32xf32>
    %11 = vector.broadcast %10 : vector<8x1x32xf32> to vector<8x8x32xf32>
    %12 = arith.mulf %9, %11 : vector<8x8x32xf32>
    %cst = arith.constant dense<0.000000e+00> : vector<8x8xf32>
    %13 = vector.multi_reduction <add>, %12, %cst [2] : vector<8x8x32xf32> to vector<8x8xf32>
    %c0_12 = arith.constant 0 : index
    %c0_13 = arith.constant 0 : index
    %14 = vector.load %arg7[%c0_12, %c0_13] : memref<32x16xbf16, #tpu.memory_space<vmem>>, vector<32x16xbf16>
    %c0_14 = arith.constant 0 : index
    %c0_15 = arith.constant 0 : index
    %15 = vector.load %arg9[%c0_14, %c0_15] : memref<32x16xbf16, #tpu.memory_space<vmem>>, vector<32x16xbf16>
    %c0_16 = arith.constant 0 : index
    %c0_17 = arith.constant 0 : index
    %16 = vector.load %arg8[%c0_16, %c0_17] : memref<1x16xf32, #tpu.memory_space<vmem>>, vector<1x16xf32>
    %c0_18 = arith.constant 0 : index
    %c0_19 = arith.constant 0 : index
    %17 = vector.load %arg10[%c0_18, %c0_19] : memref<1x16xf32, #tpu.memory_space<vmem>>, vector<1x16xf32>
    %18 = vector.shape_cast %0 : vector<8x8x32xbf16> to vector<64x32xbf16>
    %cst_20 = arith.constant dense<0.000000e+00> : vector<64x16xf32>
    %19 = tpu.matmul %18, %14, %cst_20 {dimension_numbers = #tpu.dot_dimension_numbers<[1], [0], [0], [1], [0, 0, 1, 1], [], []>} : vector<64x32xbf16>, vector<32x16xbf16>, vector<64x16xf32> -> vector<64x16xf32>
    %20 = vector.broadcast %16 : vector<1x16xf32> to vector<64x16xf32>
    %21 = arith.addf %19, %20 : vector<64x16xf32>
    %22 = vector.shape_cast %21 : vector<64x16xf32> to vector<8x8x16xf32>
    %cst_21 = arith.constant dense<0.000000e+00> : vector<8x16xf32>
    %23 = tpu.matmul %1, %14, %cst_21 {dimension_numbers = #tpu.dot_dimension_numbers<[1], [0], [0], [1], [0, 0, 1, 1], [], []>} : vector<8x32xbf16>, vector<32x16xbf16>, vector<8x16xf32> -> vector<8x16xf32>
    %24 = vector.broadcast %16 : vector<1x16xf32> to vector<8x16xf32>
    %25 = arith.addf %23, %24 : vector<8x16xf32>
    %cst_22 = arith.constant dense<0.000000e+00> : vector<8x16xf32>
    %26 = tpu.matmul %2, %15, %cst_22 {dimension_numbers = #tpu.dot_dimension_numbers<[1], [0], [0], [1], [0, 0, 1, 1], [], []>} : vector<8x32xbf16>, vector<32x16xbf16>, vector<8x16xf32> -> vector<8x16xf32>
    %27 = vector.broadcast %17 : vector<1x16xf32> to vector<8x16xf32>
    %28 = arith.addf %26, %27 : vector<8x16xf32>
    %cst_23 = arith.constant dense<0.000000e+00> : vector<8x16xf32>
    %29 = tpu.matmul %4, %14, %cst_23 {dimension_numbers = #tpu.dot_dimension_numbers<[1], [0], [0], [1], [0, 0, 1, 1], [], []>} : vector<8x32xbf16>, vector<32x16xbf16>, vector<8x16xf32> -> vector<8x16xf32>
    %30 = vector.broadcast %16 : vector<1x16xf32> to vector<8x16xf32>
    %31 = arith.addf %29, %30 : vector<8x16xf32>
    %32 = arith.mulf %28, %25 : vector<8x16xf32>
    %33 = vector.shape_cast %32 : vector<8x16xf32> to vector<8x1x16xf32>
    %34 = vector.broadcast %33 : vector<8x1x16xf32> to vector<8x8x16xf32>
    %35 = arith.mulf %22, %34 : vector<8x8x16xf32>
    %cst_24 = arith.constant dense<0.000000e+00> : vector<8x8xf32>
    %36 = vector.multi_reduction <add>, %35, %cst_24 [2] : vector<8x8x16xf32> to vector<8x8xf32>
    %37 = tpu.iota {dimensions = array<i32: 1>} : vector<8x8xi32>
    %c0_i32 = arith.constant 0 : i32
    %38 = vector.broadcast %c0_i32 : i32 to vector<8x8xi32>
    %39 = arith.cmpi eq, %37, %38 : vector<8x8xi32>
    %cst_25 = arith.constant 0.000000e+00 : f32
    %40 = vector.broadcast %cst_25 : f32 to vector<8x8xf32>
    %41 = arith.select %39, %36, %40 : vector<8x8xi1>, vector<8x8xf32>
    %cst_26 = arith.constant dense<0.000000e+00> : vector<8xf32>
    %42 = vector.multi_reduction <add>, %41, %cst_26 [1] : vector<8x8xf32> to vector<8xf32>
    %43 = vector.shape_cast %42 : vector<8xf32> to vector<8x1xf32>
    %cst_27 = arith.constant 0.000000e+00 : f32
    %44 = vector.broadcast %cst_27 : f32 to vector<8x1xf32>
    %45 = arith.subf %44, %43 : vector<8x1xf32>
    %cst_28 = arith.constant 0.000000e+00 : f32
    %46 = vector.broadcast %cst_28 : f32 to vector<8x1xf32>
    %47 = arith.maximumf %45, %46 : vector<8x1xf32>
    %48 = math.absf %43 : vector<8x1xf32>
    %cst_29 = arith.constant 0.000000e+00 : f32
    %49 = vector.broadcast %cst_29 : f32 to vector<8x1xf32>
    %50 = arith.subf %49, %48 : vector<8x1xf32>
    %51 = math.exp %50 : vector<8x1xf32>
    %52 = math.log1p %51 : vector<8x1xf32>
    %53 = arith.addf %47, %52 : vector<8x1xf32>
    %cst_30 = arith.constant 0.000000e+00 : f32
    %54 = vector.broadcast %cst_30 : f32 to vector<8x1xf32>
    %55 = arith.subf %54, %53 : vector<8x1xf32>
    %cst_31 = arith.constant 0.000000e+00 : f32
    %56 = vector.broadcast %cst_31 : f32 to vector<8x1xf32>
    %57 = arith.subf %56, %55 : vector<8x1xf32>
    %cst_32 = arith.constant 0.000000e+00 : f32
    %58 = vector.broadcast %cst_32 : f32 to vector<8x8xf32>
    %59 = arith.subf %58, %36 : vector<8x8xf32>
    %cst_33 = arith.constant 0.000000e+00 : f32
    %60 = vector.broadcast %cst_33 : f32 to vector<8x8xf32>
    %61 = arith.subf %60, %59 : vector<8x8xf32>
    %cst_34 = arith.constant 0.000000e+00 : f32
    %62 = vector.broadcast %cst_34 : f32 to vector<8x8xf32>
    %63 = arith.maximumf %61, %62 : vector<8x8xf32>
    %64 = math.absf %59 : vector<8x8xf32>
    %cst_35 = arith.constant 0.000000e+00 : f32
    %65 = vector.broadcast %cst_35 : f32 to vector<8x8xf32>
    %66 = arith.subf %65, %64 : vector<8x8xf32>
    %67 = math.exp %66 : vector<8x8xf32>
    %68 = math.log1p %67 : vector<8x8xf32>
    %69 = arith.addf %63, %68 : vector<8x8xf32>
    %cst_36 = arith.constant 0.000000e+00 : f32
    %70 = vector.broadcast %cst_36 : f32 to vector<8x8xf32>
    %71 = arith.subf %70, %69 : vector<8x8xf32>
    %cst_37 = arith.constant 0.000000e+00 : f32
    %72 = vector.broadcast %cst_37 : f32 to vector<8x8xf32>
    %73 = arith.select %39, %72, %71 : vector<8x8xi1>, vector<8x8xf32>
    %cst_38 = arith.constant dense<0.000000e+00> : vector<8xf32>
    %74 = vector.multi_reduction <add>, %73, %cst_38 [1] : vector<8x8xf32> to vector<8xf32>
    %75 = vector.shape_cast %74 : vector<8xf32> to vector<8x1xf32>
    %cst_39 = arith.constant 0.000000e+00 : f32
    %76 = vector.broadcast %cst_39 : f32 to vector<8x1xf32>
    %77 = arith.subf %76, %75 : vector<8x1xf32>
    %cst_40 = arith.constant 7.000000e+00 : f32
    %78 = vector.broadcast %cst_40 : f32 to vector<8x1xf32>
    %79 = arith.divf %77, %78 : vector<8x1xf32>
    %80 = arith.subf %13, %36 : vector<8x8xf32>
    %81 = arith.mulf %80, %80 : vector<8x8xf32>
    %cst_41 = arith.constant dense<0.000000e+00> : vector<8xf32>
    %82 = vector.multi_reduction <add>, %81, %cst_41 [1] : vector<8x8xf32> to vector<8xf32>
    %83 = vector.shape_cast %82 : vector<8xf32> to vector<8x1xf32>
    %cst_42 = arith.constant 8.000000e+00 : f32
    %84 = vector.broadcast %cst_42 : f32 to vector<8x1xf32>
    %85 = arith.divf %83, %84 : vector<8x1xf32>
    %86 = arith.mulf %22, %22 : vector<8x8x16xf32>
    %cst_43 = arith.constant dense<0.000000e+00> : vector<8x8xf32>
    %87 = vector.multi_reduction <add>, %86, %cst_43 [2] : vector<8x8x16xf32> to vector<8x8xf32>
    %88 = vector.shape_cast %87 : vector<8x8xf32> to vector<8x8x1xf32>
    %cst_44 = arith.constant 9.99999997E-7 : f32
    %89 = vector.broadcast %cst_44 : f32 to vector<8x8x1xf32>
    %90 = arith.addf %88, %89 : vector<8x8x1xf32>
    %91 = math.rsqrt %90 : vector<8x8x1xf32>
    %92 = vector.broadcast %91 : vector<8x8x1xf32> to vector<8x8x16xf32>
    %93 = arith.mulf %22, %92 : vector<8x8x16xf32>
    %94 = arith.mulf %31, %31 : vector<8x16xf32>
    %cst_45 = arith.constant dense<0.000000e+00> : vector<8xf32>
    %95 = vector.multi_reduction <add>, %94, %cst_45 [1] : vector<8x16xf32> to vector<8xf32>
    %96 = vector.shape_cast %95 : vector<8xf32> to vector<8x1xf32>
    %cst_46 = arith.constant 9.99999997E-7 : f32
    %97 = vector.broadcast %cst_46 : f32 to vector<8x1xf32>
    %98 = arith.addf %96, %97 : vector<8x1xf32>
    %99 = math.rsqrt %98 : vector<8x1xf32>
    %100 = vector.broadcast %99 : vector<8x1xf32> to vector<8x16xf32>
    %101 = arith.mulf %31, %100 : vector<8x16xf32>
    %102 = vector.extract_strided_slice %93 {offsets = [0, 0, 0], sizes = [8, 1, 16], strides = [1, 1, 1]} : vector<8x8x16xf32> to vector<8x1x16xf32>
    %103 = vector.shape_cast %101 : vector<8x16xf32> to vector<8x1x16xf32>
    %104 = arith.mulf %102, %103 : vector<8x1x16xf32>
    %cst_47 = arith.constant dense<0.000000e+00> : vector<8x1xf32>
    %105 = vector.multi_reduction <add>, %104, %cst_47 [2] : vector<8x1x16xf32> to vector<8x1xf32>
    %cst_48 = arith.constant 2.000000e+00 : f32
    %106 = vector.broadcast %cst_48 : f32 to vector<8x1xf32>
    %107 = arith.mulf %105, %106 : vector<8x1xf32>
    %108 = vector.broadcast %102 : vector<8x1x16xf32> to vector<8x8x16xf32>
    %109 = arith.mulf %108, %93 : vector<8x8x16xf32>
    %cst_49 = arith.constant dense<0.000000e+00> : vector<8x8xf32>
    %110 = vector.multi_reduction <add>, %109, %cst_49 [2] : vector<8x8x16xf32> to vector<8x8xf32>
    %cst_50 = arith.constant 2.000000e+00 : f32
    %111 = vector.broadcast %cst_50 : f32 to vector<8x8xf32>
    %112 = arith.mulf %110, %111 : vector<8x8xf32>
    %c0_i32_51 = arith.constant 0 : i32
    %113 = vector.broadcast %c0_i32_51 : i32 to vector<8x8xi32>
    %114 = arith.cmpi ne, %37, %113 : vector<8x8xi32>
    %cst_52 = arith.constant -1.000000e+30 : f32
    %115 = vector.broadcast %cst_52 : f32 to vector<8x8xf32>
    %116 = arith.select %114, %112, %115 : vector<8x8xi1>, vector<8x8xf32>
    %cst_53 = arith.constant dense<0xFF800000> : vector<8xf32>
    %117 = vector.multi_reduction <maximumf>, %116, %cst_53 [1] : vector<8x8xf32> to vector<8xf32>
    %118 = vector.shape_cast %117 : vector<8xf32> to vector<8x1xf32>
    %119 = arith.maximumf %107, %118 : vector<8x1xf32>
    %120 = arith.subf %107, %119 : vector<8x1xf32>
    %121 = math.exp %120 : vector<8x1xf32>
    %122 = vector.broadcast %119 : vector<8x1xf32> to vector<8x8xf32>
    %123 = arith.subf %112, %122 : vector<8x8xf32>
    %124 = math.exp %123 : vector<8x8xf32>
    %cst_54 = arith.constant 0.000000e+00 : f32
    %125 = vector.broadcast %cst_54 : f32 to vector<8x8xf32>
    %126 = arith.select %114, %124, %125 : vector<8x8xi1>, vector<8x8xf32>
    %cst_55 = arith.constant dense<0.000000e+00> : vector<8xf32>
    %127 = vector.multi_reduction <add>, %126, %cst_55 [1] : vector<8x8xf32> to vector<8xf32>
    %128 = vector.shape_cast %127 : vector<8xf32> to vector<8x1xf32>
    %129 = arith.addf %121, %128 : vector<8x1xf32>
    %cst_56 = arith.constant 0.000000e+00 : f32
    %130 = vector.broadcast %cst_56 : f32 to vector<8x1xf32>
    %131 = arith.subf %130, %107 : vector<8x1xf32>
    %132 = arith.addf %131, %119 : vector<8x1xf32>
    %133 = math.log %129 : vector<8x1xf32>
    %134 = arith.addf %132, %133 : vector<8x1xf32>
    %135 = arith.mulf %5, %57 : vector<8x1xf32>
    %136 = vector.shape_cast %135 : vector<8x1xf32> to vector<1x8x1xf32>
    %cst_57 = arith.constant dense<0.000000e+00> : vector<1xf32>
    %137 = vector.multi_reduction <add>, %136, %cst_57 [1, 2] : vector<1x8x1xf32> to vector<1xf32>
    %138 = vector.shape_cast %137 : vector<1xf32> to vector<1x1x1xf32>
    %139 = vector.extract %138[0, 0, 0] : f32 from vector<1x1x1xf32>
    %140 = arith.mulf %5, %79 : vector<8x1xf32>
    %141 = vector.shape_cast %140 : vector<8x1xf32> to vector<1x8x1xf32>
    %cst_58 = arith.constant dense<0.000000e+00> : vector<1xf32>
    %142 = vector.multi_reduction <add>, %141, %cst_58 [1, 2] : vector<1x8x1xf32> to vector<1xf32>
    %143 = vector.shape_cast %142 : vector<1xf32> to vector<1x1x1xf32>
    %144 = vector.extract %143[0, 0, 0] : f32 from vector<1x1x1xf32>
    %145 = arith.mulf %5, %85 : vector<8x1xf32>
    %146 = vector.shape_cast %145 : vector<8x1xf32> to vector<1x8x1xf32>
    %cst_59 = arith.constant dense<0.000000e+00> : vector<1xf32>
    %147 = vector.multi_reduction <add>, %146, %cst_59 [1, 2] : vector<1x8x1xf32> to vector<1xf32>
    %148 = vector.shape_cast %147 : vector<1xf32> to vector<1x1x1xf32>
    %149 = vector.extract %148[0, 0, 0] : f32 from vector<1x1x1xf32>
    %150 = arith.mulf %5, %134 : vector<8x1xf32>
    %151 = vector.shape_cast %150 : vector<8x1xf32> to vector<1x8x1xf32>
    %cst_60 = arith.constant dense<0.000000e+00> : vector<1xf32>
    %152 = vector.multi_reduction <add>, %151, %cst_60 [1, 2] : vector<1x8x1xf32> to vector<1xf32>
    %153 = vector.shape_cast %152 : vector<1xf32> to vector<1x1x1xf32>
    %154 = vector.extract %153[0, 0, 0] : f32 from vector<1x1x1xf32>
    %155 = vector.shape_cast %5 : vector<8x1xf32> to vector<1x8x1xf32>
    %cst_61 = arith.constant dense<0.000000e+00> : vector<1xf32>
    %156 = vector.multi_reduction <add>, %155, %cst_61 [1, 2] : vector<1x8x1xf32> to vector<1xf32>
    %157 = vector.shape_cast %156 : vector<1xf32> to vector<1x1x1xf32>
    %158 = vector.extract %157[0, 0, 0] : f32 from vector<1x1x1xf32>
    %159 = tpu.iota {dimensions = array<i32: 1>} : vector<8x128xi32>
    %c0_i32_62 = arith.constant 0 : i32
    %160 = vector.broadcast %c0_i32_62 : i32 to vector<8x128xi32>
    %161 = arith.cmpi eq, %159, %160 : vector<8x128xi32>
    %cst_63 = arith.constant 0.000000e+00 : f32
    %162 = vector.broadcast %139 : f32 to vector<8x128xf32>
    %163 = vector.broadcast %cst_63 : f32 to vector<8x128xf32>
    %164 = arith.select %161, %162, %163 : vector<8x128xi1>, vector<8x128xf32>
    %c1_i32 = arith.constant 1 : i32
    %165 = vector.broadcast %c1_i32 : i32 to vector<8x128xi32>
    %166 = arith.cmpi eq, %159, %165 : vector<8x128xi32>
    %cst_64 = arith.constant 0.000000e+00 : f32
    %167 = vector.broadcast %144 : f32 to vector<8x128xf32>
    %168 = vector.broadcast %cst_64 : f32 to vector<8x128xf32>
    %169 = arith.select %166, %167, %168 : vector<8x128xi1>, vector<8x128xf32>
    %170 = arith.addf %164, %169 : vector<8x128xf32>
    %c2_i32 = arith.constant 2 : i32
    %171 = vector.broadcast %c2_i32 : i32 to vector<8x128xi32>
    %172 = arith.cmpi eq, %159, %171 : vector<8x128xi32>
    %cst_65 = arith.constant 0.000000e+00 : f32
    %173 = vector.broadcast %149 : f32 to vector<8x128xf32>
    %174 = vector.broadcast %cst_65 : f32 to vector<8x128xf32>
    %175 = arith.select %172, %173, %174 : vector<8x128xi1>, vector<8x128xf32>
    %176 = arith.addf %170, %175 : vector<8x128xf32>
    %c3_i32 = arith.constant 3 : i32
    %177 = vector.broadcast %c3_i32 : i32 to vector<8x128xi32>
    %178 = arith.cmpi eq, %159, %177 : vector<8x128xi32>
    %cst_66 = arith.constant 0.000000e+00 : f32
    %179 = vector.broadcast %154 : f32 to vector<8x128xf32>
    %180 = vector.broadcast %cst_66 : f32 to vector<8x128xf32>
    %181 = arith.select %178, %179, %180 : vector<8x128xi1>, vector<8x128xf32>
    %182 = arith.addf %176, %181 : vector<8x128xf32>
    %c4_i32 = arith.constant 4 : i32
    %183 = vector.broadcast %c4_i32 : i32 to vector<8x128xi32>
    %184 = arith.cmpi eq, %159, %183 : vector<8x128xi32>
    %cst_67 = arith.constant 0.000000e+00 : f32
    %185 = vector.broadcast %158 : f32 to vector<8x128xf32>
    %186 = vector.broadcast %cst_67 : f32 to vector<8x128xf32>
    %187 = arith.select %184, %185, %186 : vector<8x128xi1>, vector<8x128xf32>
    %188 = arith.addf %182, %187 : vector<8x128xf32>
    %189 = vector.shape_cast %188 : vector<8x128xf32> to vector<1x8x128xf32>
    %c0_68 = arith.constant 0 : index
    %c0_69 = arith.constant 0 : index
    %c0_70 = arith.constant 0 : index
    %190 = vector.load %arg11[%c0_68, %c0_69, %c0_70] : memref<1x8x128xf32, #tpu.memory_space<vmem>>, vector<1x8x128xf32>
    tpu.vector_store %arg11[%c0_68, %c0_69, %c0_70], %189 {strides = array<i32>} : memref<1x8x128xf32, #tpu.memory_space<vmem>>, vector<1x8x128xf32>,
    return
  }
  func.func @transform_0(%arg0: i32) -> (i32, i32, i32) {
    %c0_i32 = arith.constant 0 : i32
    %c0_i32_0 = arith.constant 0 : i32
    %c0_i32_1 = arith.constant 0 : i32
    return %arg0, %c0_i32, %c0_i32_0 : i32, i32, i32
  }
  func.func @transform_1(%arg0: i32) -> (i32, i32) {
    %c0_i32 = arith.constant 0 : i32
    %c0_i32_0 = arith.constant 0 : i32
    return %arg0, %c0_i32 : i32, i32
  }
  func.func @transform_2(%arg0: i32) -> (i32, i32) {
    %c0_i32 = arith.constant 0 : i32
    %c0_i32_0 = arith.constant 0 : i32
    return %arg0, %c0_i32 : i32, i32
  }
  func.func @transform_3(%arg0: i32) -> (i32, i32) {
    %c0_i32 = arith.constant 0 : i32
    %c0_i32_0 = arith.constant 0 : i32
    return %arg0, %c0_i32 : i32, i32
  }
  func.func @transform_4(%arg0: i32) -> (i32, i32) {
    %c0_i32 = arith.constant 0 : i32
    %c0_i32_0 = arith.constant 0 : i32
    return %arg0, %c0_i32 : i32, i32
  }
  func.func @transform_5(%arg0: i32) -> (i32, i32) {
    %c0_i32 = arith.constant 0 : i32
    %c0_i32_0 = arith.constant 0 : i32
    return %arg0, %c0_i32 : i32, i32
  }
  func.func @transform_6(%arg0: i32) -> (i32, i32) {
    %c0_i32 = arith.constant 0 : i32
    %c0_i32_0 = arith.constant 0 : i32
    %c0_i32_1 = arith.constant 0 : i32
    return %c0_i32, %c0_i32_0 : i32, i32
  }
  func.func @transform_7(%arg0: i32) -> (i32, i32) {
    %c0_i32 = arith.constant 0 : i32
    %c0_i32_0 = arith.constant 0 : i32
    %c0_i32_1 = arith.constant 0 : i32
    return %c0_i32, %c0_i32_0 : i32, i32
  }
  func.func @transform_8(%arg0: i32) -> (i32, i32) {
    %c0_i32 = arith.constant 0 : i32
    %c0_i32_0 = arith.constant 0 : i32
    %c0_i32_1 = arith.constant 0 : i32
    return %c0_i32, %c0_i32_0 : i32, i32
  }
  func.func @transform_9(%arg0: i32) -> (i32, i32) {
    %c0_i32 = arith.constant 0 : i32
    %c0_i32_0 = arith.constant 0 : i32
    %c0_i32_1 = arith.constant 0 : i32
    return %c0_i32, %c0_i32_0 : i32, i32
  }
  func.func @transform_10(%arg0: i32) -> (i32, i32, i32) {
    %c0_i32 = arith.constant 0 : i32
    %c0_i32_0 = arith.constant 0 : i32
    %c0_i32_1 = arith.constant 0 : i32
    return %arg0, %c0_i32, %c0_i32_0 : i32, i32, i32
  }
}

</mosaic_0001>

<llo_original>
// kernel: tpu_custom_call.1
$region0: #{tpu_custom_call.1}
  #allocation0 [shape = 'u32[]', space=smem, size = 0x4, offset = 0x4, fixed_abs, tag = 'smem constant byte address 0x4 - core index']
  #allocation1 [shape = 'u32[144,128]{1,0:T(1,128)}', space=vmem, size = 0x12000, scoped, tag = 'internal scratch']
  %s0 = inlined_call_operand.vmem [shape: bf16[8,8,32], index: 0, kind: input, shape index: {}]
  %s1 = inlined_call_operand.vmem [shape: bf16[8,32], index: 1, kind: input, shape index: {}]
  %s2 = inlined_call_operand.vmem [shape: bf16[8,32], index: 2, kind: input, shape index: {}]
  %s3 = inlined_call_operand.vmem [shape: bf16[8,32], index: 3, kind: input, shape index: {}]
  %s4 = inlined_call_operand.vmem [shape: bf16[8,32], index: 4, kind: input, shape index: {}]
  %s5 = inlined_call_operand.vmem [shape: f32[8,1], index: 5, kind: input, shape index: {}]
  %s6 = inlined_call_operand.vmem [shape: bf16[32,16], index: 6, kind: input, shape index: {}]
  %s7 = inlined_call_operand.vmem [shape: f32[1,16], index: 7, kind: input, shape index: {}]
  %s8 = inlined_call_operand.vmem [shape: bf16[32,16], index: 8, kind: input, shape index: {}]
  %s9 = inlined_call_operand.vmem [shape: f32[1,16], index: 9, kind: input, shape index: {}]
  %s10 = inlined_call_operand.hbm [shape: f32[1,8,128], index: 10, kind: output, shape index: {}]
  %s11 = sld [smem:[#allocation0]]
  $region50: #{tpu_custom_call.1} parent=0
    _
  %s13 = ssub.s32 1, %s11
  %s14 = scalar_select 0, %s13, %s11
  $region1: #{tpu_custom_call.1} parent=0
    #allocation2 [shape = 'u8[4096]{0}', space=vmem, size = 0x1000, scoped, tag = 'output window, operand 0, single buffered']
    #allocation3 [shape = 's32[1]{0}', space=sflag, size = 0x4, scoped, tag = 'scoped memory for tpu_custom_call.1']
    %15 = vsyncpa [#allocation3], 0
    // Predicated region
    $region2: #{tpu_custom_call.1} parent=1 // pred_check
      _
    $region3: #{tpu_custom_call.1} parent=1 // pred_check_branch
      %17 = sbr.rel (0) target = $region5
    $region4: #{tpu_custom_call.1} parent=1 // pred_region
      _
    $region5: #{tpu_custom_call.1} parent=1 // pred_fallthru
      _
    // Predicated region
    $region6: #{tpu_custom_call.1} parent=1 // pred_check
      _
    $region7: #{tpu_custom_call.1} parent=1 // pred_check_branch
      %19 = sbr.rel (0) target = $region9
    $region8: #{tpu_custom_call.1} parent=1 // pred_region
      _
    $region9: #{tpu_custom_call.1} parent=1 // pred_fallthru
      _
    // Predicated region
    $region10: #{tpu_custom_call.1} parent=1 // pred_check
      _
    $region11: #{tpu_custom_call.1} parent=1 // pred_check_branch
      %21 = sbr.rel (0) target = $region13
    $region12: #{tpu_custom_call.1} parent=1 // pred_region
      _
    $region13: #{tpu_custom_call.1} parent=1 // pred_fallthru
      _
    // Predicated region
    $region14: #{tpu_custom_call.1} parent=1 // pred_check
      _
    $region15: #{tpu_custom_call.1} parent=1 // pred_check_branch
      %23 = sbr.rel (0) target = $region17
    $region16: #{tpu_custom_call.1} parent=1 // pred_region
      _
    $region17: #{tpu_custom_call.1} parent=1 // pred_fallthru
      _
    // Predicated region
    $region18: #{tpu_custom_call.1} parent=1 // pred_check
      _
    $region19: #{tpu_custom_call.1} parent=1 // pred_check_branch
      %25 = sbr.rel (0) target = $region21
    $region20: #{tpu_custom_call.1} parent=1 // pred_region
      _
    $region21: #{tpu_custom_call.1} parent=1 // pred_fallthru
      _
    // Predicated region
    $region22: #{tpu_custom_call.1} parent=1 // pred_check
      _
    $region23: #{tpu_custom_call.1} parent=1 // pred_check_branch
      %27 = sbr.rel (0) target = $region25
    $region24: #{tpu_custom_call.1} parent=1 // pred_region
      _
    $region25: #{tpu_custom_call.1} parent=1 // pred_fallthru
      _
    // Predicated region
    $region26: #{tpu_custom_call.1} parent=1 // pred_check
      _
    $region27: #{tpu_custom_call.1} parent=1 // pred_check_branch
      %29 = sbr.rel (0) target = $region29
    $region28: #{tpu_custom_call.1} parent=1 // pred_region
      _
    $region29: #{tpu_custom_call.1} parent=1 // pred_fallthru
      _
    // Predicated region
    $region30: #{tpu_custom_call.1} parent=1 // pred_check
      _
    $region31: #{tpu_custom_call.1} parent=1 // pred_check_branch
      %31 = sbr.rel (0) target = $region33
    $region32: #{tpu_custom_call.1} parent=1 // pred_region
      _
    $region33: #{tpu_custom_call.1} parent=1 // pred_fallthru
      _
    // Predicated region
    $region34: #{tpu_custom_call.1} parent=1 // pred_check
      _
    $region35: #{tpu_custom_call.1} parent=1 // pred_check_branch
      %33 = sbr.rel (0) target = $region37
    $region36: #{tpu_custom_call.1} parent=1 // pred_region
      _
    $region37: #{tpu_custom_call.1} parent=1 // pred_fallthru
      _
    // Predicated region
    $region38: #{tpu_custom_call.1} parent=1 // pred_check
      _
    $region39: #{tpu_custom_call.1} parent=1 // pred_check_branch
      %35 = sbr.rel (0) target = $region41
    $region40: #{tpu_custom_call.1} parent=1 // pred_region
      _
    $region41: #{tpu_custom_call.1} parent=1 // pred_fallthru
      _
    %v37 = vld [vmem:[%s0] sm:$0xf]
    %v38 = vld [vmem:[%s0 + $0x4] sm:$0xf]
    %v39 = vld [vmem:[%s0 + $0x8] sm:$0xf]
    %v40 = vld [vmem:[%s0 + $0xc] sm:$0xf]
    %v41 = vld [vmem:[%s0 + $0x10] sm:$0xf]
    %v42 = vld [vmem:[%s0 + $0x14] sm:$0xf]
    %v43 = vld [vmem:[%s0 + $0x18] sm:$0xf]
    %v44 = vld [vmem:[%s0 + $0x1c] sm:$0xf]
    %v45 = vld [vmem:[%s1] sm:$0xf]
    %v46 = vld [vmem:[%s2] sm:$0xf]
    %v47 = vld [vmem:[%s3] sm:$0xf]
    %v48 = vld [vmem:[%s4] sm:$0xf]
    %v49 = vld [vmem:[%s5] sm:$0xff]
    %v50 = vunpack.c.l.bf16 %v47
    %v51 = vunpack.c.l.bf16 %v45
    %v52 = vmul.f32 %v50, %v51
    %v53 = vunpack.c.l.bf16 %v37
    %v54 = vunpack.c.l.bf16 %v38
    %v55 = vunpack.c.l.bf16 %v39
    %v56 = vunpack.c.l.bf16 %v40
    %v57 = vunpack.c.l.bf16 %v41
    %v58 = vunpack.c.l.bf16 %v42
    %v59 = vunpack.c.l.bf16 %v43
    %v60 = vunpack.c.l.bf16 %v44
    %v62 = vcombine.high %v52, %v52
    %v64 = vunpack.c.l.s4 1966171168
    %v65 = vunpack.c.0.s8 %v64
    %v66 = vlaneseq
    %v67 = vshrl.u32 %v66, 7
    %v68 = vsub.s32 %v65, %v67
    %v69 = vrot.slane %v52, %v68
    %v71 = vunpack.c.l.s4 1966171168
    %v72 = vunpack.c.0.s8 %v71
    %v73 = vlaneseq
    %v74 = vshrl.u32 %v73, 7
    %v75 = vsub.s32 %v72, %v74
    %v76 = vrot.slane %v62, %v75
    %v77 = vcombine.high %v69, %v69
    %v78 = vcombine.high %v76, %v76
    %v80 = vunpack.c.l.s4 1966171168
    %v81 = vunpack.c.0.s8 %v80
    %v82 = vlaneseq
    %v83 = vshrl.u32 %v82, 7
    %v84 = vsub.s32 %v81, %v83
    %v85 = vrot.slane %v69, %v84
    %v87 = vunpack.c.l.s4 1966171168
    %v88 = vunpack.c.0.s8 %v87
    %v89 = vlaneseq
    %v90 = vshrl.u32 %v89, 7
    %v91 = vsub.s32 %v88, %v90
    %v92 = vrot.slane %v76, %v91
    %v94 = vunpack.c.l.s4 1966171168
    %v95 = vunpack.c.0.s8 %v94
    %v96 = vlaneseq
    %v97 = vshrl.u32 %v96, 7
    %v98 = vsub.s32 %v95, %v97
    %v99 = vrot.slane %v77, %v98
    %v101 = vunpack.c.l.s4 1966171168
    %v102 = vunpack.c.0.s8 %v101
    %v103 = vlaneseq
    %v104 = vshrl.u32 %v103, 7
    %v105 = vsub.s32 %v102, %v104
    %v106 = vrot.slane %v78, %v105
    %v107 = vcombine.high %v85, %v85
    %v108 = vcombine.high %v92, %v92
    %v109 = vcombine.high %v99, %v99
    %v110 = vcombine.high %v106, %v106
    %v111 = vlaneseq
    %v112 = vshrl.u32 %v111, 7
    %v113 = vsub.s32 0, %v112
    %v114 = vrot.slane %v85, %v113
    %v115 = vlaneseq
    %v116 = vshrl.u32 %v115, 7
    %v117 = vsub.s32 0, %v116
    %v118 = vrot.slane %v99, %v117
    %v119 = vlaneseq
    %v120 = vshrl.u32 %v119, 7
    %v121 = vsub.s32 0, %v120
    %v122 = vrot.slane %v107, %v121
    %v123 = vlaneseq
    %v124 = vshrl.u32 %v123, 7
    %v125 = vsub.s32 0, %v124
    %v126 = vrot.slane %v109, %v125
    %v127 = vlaneseq
    %v128 = vshrl.u32 %v127, 7
    %v129 = vsub.s32 0, %v128
    %v130 = vrot.slane %v92, %v129
    %v131 = vlaneseq
    %v132 = vshrl.u32 %v131, 7
    %v133 = vsub.s32 0, %v132
    %v134 = vrot.slane %v106, %v133
    %v135 = vlaneseq
    %v136 = vshrl.u32 %v135, 7
    %v137 = vsub.s32 0, %v136
    %v138 = vrot.slane %v108, %v137
    %v139 = vlaneseq
    %v140 = vshrl.u32 %v139, 7
    %v141 = vsub.s32 0, %v140
    %v142 = vrot.slane %v110, %v141
    %v151 = vmul.f32 %v53, %v114
    %v152 = vmul.f32 %v54, %v118
    %v153 = vmul.f32 %v55, %v122
    %v154 = vmul.f32 %v56, %v126
    %v155 = vmul.f32 %v57, %v130
    %v156 = vmul.f32 %v58, %v134
    %v157 = vmul.f32 %v59, %v138
    %v158 = vmul.f32 %v60, %v142
    %vm159 = vcmask 261120
    %v160 = vsel %vm159, %v151, 0.0
    %161 = vadd.xlane.f32.xlu0 %v160
    %v162 = vpop.xlane.xlu0 %161
    %v163 = vsel %vm159, %v152, 0.0
    %164 = vadd.xlane.f32.xlu0 %v163
    %v165 = vpop.xlane.xlu0 %164
    %v166 = vsel %vm159, %v153, 0.0
    %167 = vadd.xlane.f32.xlu0 %v166
    %v168 = vpop.xlane.xlu0 %167
    %v169 = vsel %vm159, %v154, 0.0
    %170 = vadd.xlane.f32.xlu0 %v169
    %v171 = vpop.xlane.xlu0 %170
    %v172 = vsel %vm159, %v155, 0.0
    %173 = vadd.xlane.f32.xlu0 %v172
    %v174 = vpop.xlane.xlu0 %173
    %v175 = vsel %vm159, %v156, 0.0
    %176 = vadd.xlane.f32.xlu0 %v175
    %v177 = vpop.xlane.xlu0 %176
    %v178 = vsel %vm159, %v157, 0.0
    %179 = vadd.xlane.f32.xlu0 %v178
    %v180 = vpop.xlane.xlu0 %179
    %v181 = vsel %vm159, %v158, 0.0
    %182 = vadd.xlane.f32.xlu0 %v181
    %v183 = vpop.xlane.xlu0 %182
    %v184 = vld [vmem:[%s6] sm:$0xf]
    %v185 = vld [vmem:[%s6 + $0x4] sm:$0xf]
    %v186 = vld [vmem:[%s6 + $0x8] sm:$0xf]
    %v187 = vld [vmem:[%s6 + $0xc] sm:$0xf]
    %v188 = vld [vmem:[%s8] sm:$0xf]
    %v189 = vld [vmem:[%s8 + $0x4] sm:$0xf]
    %v190 = vld [vmem:[%s8 + $0x8] sm:$0xf]
    %v191 = vld [vmem:[%s8 + $0xc] sm:$0xf]
    %v192 = vld [vmem:[%s7] sm:$0x1]
    %v193 = vld [vmem:[%s9] sm:$0x1]
    %v195 = vlaneseq
    %v196 = vshrl.u32 %v195, 7
    %v197 = vsub.s32 0, %v196
    %v198 = vrot.slane %v192, %v197
    %v208 = vunpack.c.l.b16 %v37
    %v209 = vunpack.c.l.b16 %v38
    %v210 = vunpack.c.l.b16 %v39
    %v211 = vunpack.c.l.b16 %v40
    %v212 = vunpack.c.l.b16 %v41
    %v213 = vunpack.c.l.b16 %v42
    %v214 = vunpack.c.l.b16 %v43
    %v215 = vunpack.c.l.b16 %v44
    %v216 = vpack.c.b16 %v209, %v208
    %v217 = vpack.c.b16 %v211, %v210
    %v218 = vpack.c.b16 %v213, %v212
    %v219 = vpack.c.b16 %v215, %v214
    %v224 = vunpack.c.l.b16 %v184
    %v225 = vunpack.c.l.b16 %v185
    %v226 = vunpack.c.l.b16 %v186
    %v227 = vunpack.c.l.b16 %v187
    %v228 = vpack.c.b16 %v225, %v224
    %v229 = vpack.c.b16 %v227, %v226
    %v233 = vsel %vm159, %v216, 0
    %v236 = vsel %vm159, %v217, 0
    %v239 = vsel %vm159, %v218, 0
    %v242 = vsel %vm159, %v219, 0
    %244 = vmatprep.subr.bf16.mxu0 0
    %245 = vmatpush1.bf16.msra.mxu0 0
    %246 = vmatprep.subr.bf16.mxu0 0
    %247 = vmatpush1.bf16.msra.mxu0 0
    %248 = vmatprep.subr.bf16.mxu0 0
    %249 = vmatpush1.bf16.msra.mxu0 0
    %250 = vmatprep.subr.bf16.mxu0 0
    %251 = vmatpush1.bf16.msra.mxu0 0
    %252 = vmatprep.subr.bf16.mxu0 0
    %253 = vmatpush1.bf16.msra.mxu0 0
    %254 = vmatprep.subr.bf16.mxu0 0
    %255 = vmatpush1.bf16.msra.mxu0 0
    %256 = vmatprep.subr.bf16.mxu0 0
    %257 = vmatpush1.bf16.msra.mxu0 %v229
    %258 = vmatprep.subr.bf16.mxu0 0
    %259 = vmatpush1.bf16.msra.mxu0 %v228
    %260 = vmatprep.subr.bf16.mxu0 0
    %261 = vmatpush2.bf16.msra.mxu0 0
    %262 = vmatprep.subr.bf16.mxu0 0
    %263 = vmatpush2.bf16.msra.mxu0 0
    %264 = vmatprep.subr.bf16.mxu0 0
    %265 = vmatpush2.bf16.msra.mxu0 0
    %266 = vmatprep.subr.bf16.mxu0 0
    %267 = vmatpush2.bf16.msra.mxu0 0
    %268 = vmatprep.subr.bf16.mxu0 0
    %269 = vmatpush2.bf16.msra.mxu0 0
    %270 = vmatprep.subr.bf16.mxu0 0
    %271 = vmatpush2.bf16.msra.mxu0 0
    %272 = vmatprep.subr.bf16.mxu0 0
    %273 = vmatpush2.bf16.msra.mxu0 0
    %274 = vmatprep.subr.bf16.mxu0 0
    %275 = vmatpush2.bf16.msra.mxu0 0
    %276 = vmatprep.mubr.bf16.mxu0 0
    %277 = vmatmul.mubr.bf16.gmra.mxu0 %v233
    %v278 = vpop.f32.mrf.mxu0
    %v279 = vadd.f32 %v198, %v278
    %v280 = vpop.f32.mrf.mxu0
    %v281 = vpop.f32.mrf.mxu0
    %v282 = vadd.f32 %v198, %v281
    %v283 = vpop.f32.mrf.mxu0
    %284 = vmatprep.mubr.bf16.mxu0 0
    %285 = vmatmul.mubr.bf16.gmra.mxu0 %v236
    %v286 = vpop.f32.mrf.mxu0
    %v287 = vadd.f32 %v198, %v286
    %v288 = vpop.f32.mrf.mxu0
    %v289 = vpop.f32.mrf.mxu0
    %v290 = vadd.f32 %v198, %v289
    %v291 = vpop.f32.mrf.mxu0
    %292 = vmatprep.mubr.bf16.mxu0 0
    %293 = vmatmul.mubr.bf16.gmra.mxu0 %v239
    %v294 = vpop.f32.mrf.mxu0
    %v295 = vadd.f32 %v198, %v294
    %v296 = vpop.f32.mrf.mxu0
    %v297 = vpop.f32.mrf.mxu0
    %v298 = vadd.f32 %v198, %v297
    %v299 = vpop.f32.mrf.mxu0
    %300 = vmatprep.mubr.bf16.mxu0 0
    %301 = vmatmul.mubr.bf16.gmra.mxu0 %v242
    %v302 = vpop.f32.mrf.mxu0
    %v303 = vadd.f32 %v198, %v302
    %v304 = vpop.f32.mrf.mxu0
    %v305 = vpop.f32.mrf.mxu0
    %v306 = vadd.f32 %v198, %v305
    %v307 = vpop.f32.mrf.mxu0
    %308 = vdwg.mxu0
    %v310 = vsel %vm159, %v45, 0
    %312 = vmatprep.subr.bf16.mxu0 0
    %313 = vmatpush1.bf16.msra.mxu0 0
    %314 = vmatprep.subr.bf16.mxu0 0
    %315 = vmatpush1.bf16.msra.mxu0 0
    %316 = vmatprep.subr.bf16.mxu0 0
    %317 = vmatpush1.bf16.msra.mxu0 0
    %318 = vmatprep.subr.bf16.mxu0 0
    %319 = vmatpush1.bf16.msra.mxu0 0
    %320 = vmatprep.subr.bf16.mxu0 0
    %321 = vmatpush1.bf16.msra.mxu0 0
    %322 = vmatprep.subr.bf16.mxu0 0
    %323 = vmatpush1.bf16.msra.mxu0 0
    %324 = vmatprep.subr.bf16.mxu0 0
    %325 = vmatpush1.bf16.msra.mxu0 %v229
    %326 = vmatprep.subr.bf16.mxu0 0
    %327 = vmatpush1.bf16.msra.mxu0 %v228
    %328 = vmatprep.subr.bf16.mxu0 0
    %329 = vmatpush2.bf16.msra.mxu0 0
    %330 = vmatprep.subr.bf16.mxu0 0
    %331 = vmatpush2.bf16.msra.mxu0 0
    %332 = vmatprep.subr.bf16.mxu0 0
    %333 = vmatpush2.bf16.msra.mxu0 0
    %334 = vmatprep.subr.bf16.mxu0 0
    %335 = vmatpush2.bf16.msra.mxu0 0
    %336 = vmatprep.subr.bf16.mxu0 0
    %337 = vmatpush2.bf16.msra.mxu0 0
    %338 = vmatprep.subr.bf16.mxu0 0
    %339 = vmatpush2.bf16.msra.mxu0 0
    %340 = vmatprep.subr.bf16.mxu0 0
    %341 = vmatpush2.bf16.msra.mxu0 0
    %342 = vmatprep.subr.bf16.mxu0 0
    %343 = vmatpush2.bf16.msra.mxu0 0
    %344 = vmatprep.mubr.bf16.mxu0 0
    %345 = vmatmul.mubr.bf16.gmra.mxu0 %v310
    %v346 = vpop.f32.mrf.mxu0
    %v347 = vadd.f32 %v198, %v346
    %v348 = vpop.f32.mrf.mxu0
    %v349 = vpop.f32.mrf.mxu0
    %v350 = vpop.f32.mrf.mxu0
    %351 = vdwg.mxu0
    %v353 = vlaneseq
    %v354 = vshrl.u32 %v353, 7
    %v355 = vsub.s32 0, %v354
    %v356 = vrot.slane %v193, %v355
    %v362 = vunpack.c.l.b16 %v188
    %v363 = vunpack.c.l.b16 %v189
    %v364 = vunpack.c.l.b16 %v190
    %v365 = vunpack.c.l.b16 %v191
    %v366 = vpack.c.b16 %v363, %v362
    %v367 = vpack.c.b16 %v365, %v364
    %v371 = vsel %vm159, %v46, 0
    %373 = vmatprep.subr.bf16.mxu0 0
    %374 = vmatpush1.bf16.msra.mxu0 0
    %375 = vmatprep.subr.bf16.mxu0 0
    %376 = vmatpush1.bf16.msra.mxu0 0
    %377 = vmatprep.subr.bf16.mxu0 0
    %378 = vmatpush1.bf16.msra.mxu0 0
    %379 = vmatprep.subr.bf16.mxu0 0
    %380 = vmatpush1.bf16.msra.mxu0 0
    %381 = vmatprep.subr.bf16.mxu0 0
    %382 = vmatpush1.bf16.msra.mxu0 0
    %383 = vmatprep.subr.bf16.mxu0 0
    %384 = vmatpush1.bf16.msra.mxu0 0
    %385 = vmatprep.subr.bf16.mxu0 0
    %386 = vmatpush1.bf16.msra.mxu0 %v367
    %387 = vmatprep.subr.bf16.mxu0 0
    %388 = vmatpush1.bf16.msra.mxu0 %v366
    %389 = vmatprep.subr.bf16.mxu0 0
    %390 = vmatpush2.bf16.msra.mxu0 0
    %391 = vmatprep.subr.bf16.mxu0 0
    %392 = vmatpush2.bf16.msra.mxu0 0
    %393 = vmatprep.subr.bf16.mxu0 0
    %394 = vmatpush2.bf16.msra.mxu0 0
    %395 = vmatprep.subr.bf16.mxu0 0
    %396 = vmatpush2.bf16.msra.mxu0 0
    %397 = vmatprep.subr.bf16.mxu0 0
    %398 = vmatpush2.bf16.msra.mxu0 0
    %399 = vmatprep.subr.bf16.mxu0 0
    %400 = vmatpush2.bf16.msra.mxu0 0
    %401 = vmatprep.subr.bf16.mxu0 0
    %402 = vmatpush2.bf16.msra.mxu0 0
    %403 = vmatprep.subr.bf16.mxu0 0
    %404 = vmatpush2.bf16.msra.mxu0 0
    %405 = vmatprep.mubr.bf16.mxu0 0
    %406 = vmatmul.mubr.bf16.gmra.mxu0 %v371
    %v407 = vpop.f32.mrf.mxu0
    %v408 = vadd.f32 %v356, %v407
    %v409 = vpop.f32.mrf.mxu0
    %v410 = vpop.f32.mrf.mxu0
    %v411 = vpop.f32.mrf.mxu0
    %412 = vdwg.mxu0
    %v414 = vsel %vm159, %v48, 0
    %416 = vmatprep.subr.bf16.mxu0 0
    %417 = vmatpush1.bf16.msra.mxu0 0
    %418 = vmatprep.subr.bf16.mxu0 0
    %419 = vmatpush1.bf16.msra.mxu0 0
    %420 = vmatprep.subr.bf16.mxu0 0
    %421 = vmatpush1.bf16.msra.mxu0 0
    %422 = vmatprep.subr.bf16.mxu0 0
    %423 = vmatpush1.bf16.msra.mxu0 0
    %424 = vmatprep.subr.bf16.mxu0 0
    %425 = vmatpush1.bf16.msra.mxu0 0
    %426 = vmatprep.subr.bf16.mxu0 0
    %427 = vmatpush1.bf16.msra.mxu0 0
    %428 = vmatprep.subr.bf16.mxu0 0
    %429 = vmatpush1.bf16.msra.mxu0 %v229
    %430 = vmatprep.subr.bf16.mxu0 0
    %431 = vmatpush1.bf16.msra.mxu0 %v228
    %432 = vmatprep.subr.bf16.mxu0 0
    %433 = vmatpush2.bf16.msra.mxu0 0
    %434 = vmatprep.subr.bf16.mxu0 0
    %435 = vmatpush2.bf16.msra.mxu0 0
    %436 = vmatprep.subr.bf16.mxu0 0
    %437 = vmatpush2.bf16.msra.mxu0 0
    %438 = vmatprep.subr.bf16.mxu0 0
    %439 = vmatpush2.bf16.msra.mxu0 0
    %440 = vmatprep.subr.bf16.mxu0 0
    %441 = vmatpush2.bf16.msra.mxu0 0
    %442 = vmatprep.subr.bf16.mxu0 0
    %443 = vmatpush2.bf16.msra.mxu0 0
    %444 = vmatprep.subr.bf16.mxu0 0
    %445 = vmatpush2.bf16.msra.mxu0 0
    %446 = vmatprep.subr.bf16.mxu0 0
    %447 = vmatpush2.bf16.msra.mxu0 0
    %448 = vmatprep.mubr.bf16.mxu0 0
    %449 = vmatmul.mubr.bf16.gmra.mxu0 %v414
    %v450 = vpop.f32.mrf.mxu0
    %v451 = vadd.f32 %v198, %v450
    %v452 = vpop.f32.mrf.mxu0
    %v453 = vpop.f32.mrf.mxu0
    %v454 = vpop.f32.mrf.mxu0
    %455 = vdwg.mxu0
    %v456 = vmul.f32 %v408, %v347
    %v458 = vcombine.high %v456, %v456
    %v460 = vunpack.c.l.s4 1966171168
    %v461 = vunpack.c.0.s8 %v460
    %v462 = vlaneseq
    %v463 = vshrl.u32 %v462, 7
    %v464 = vsub.s32 %v461, %v463
    %v465 = vrot.slane %v456, %v464
    %v467 = vunpack.c.l.s4 1966171168
    %v468 = vunpack.c.0.s8 %v467
    %v469 = vlaneseq
    %v470 = vshrl.u32 %v469, 7
    %v471 = vsub.s32 %v468, %v470
    %v472 = vrot.slane %v458, %v471
    %v473 = vcombine.high %v465, %v465
    %v474 = vcombine.high %v472, %v472
    %v476 = vunpack.c.l.s4 1966171168
    %v477 = vunpack.c.0.s8 %v476
    %v478 = vlaneseq
    %v479 = vshrl.u32 %v478, 7
    %v480 = vsub.s32 %v477, %v479
    %v481 = vrot.slane %v465, %v480
    %v483 = vunpack.c.l.s4 1966171168
    %v484 = vunpack.c.0.s8 %v483
    %v485 = vlaneseq
    %v486 = vshrl.u32 %v485, 7
    %v487 = vsub.s32 %v484, %v486
    %v488 = vrot.slane %v472, %v487
    %v490 = vunpack.c.l.s4 1966171168
    %v491 = vunpack.c.0.s8 %v490
    %v492 = vlaneseq
    %v493 = vshrl.u32 %v492, 7
    %v494 = vsub.s32 %v491, %v493
    %v495 = vrot.slane %v473, %v494
    %v497 = vunpack.c.l.s4 1966171168
    %v498 = vunpack.c.0.s8 %v497
    %v499 = vlaneseq
    %v500 = vshrl.u32 %v499, 7
    %v501 = vsub.s32 %v498, %v500
    %v502 = vrot.slane %v474, %v501
    %v503 = vcombine.high %v481, %v481
    %v504 = vcombine.high %v488, %v488
    %v505 = vcombine.high %v495, %v495
    %v506 = vcombine.high %v502, %v502
    %v507 = vlaneseq
    %v508 = vshrl.u32 %v507, 7
    %v509 = vsub.s32 0, %v508
    %v510 = vrot.slane %v481, %v509
    %v511 = vlaneseq
    %v512 = vshrl.u32 %v511, 7
    %v513 = vsub.s32 0, %v512
    %v514 = vrot.slane %v495, %v513
    %v515 = vlaneseq
    %v516 = vshrl.u32 %v515, 7
    %v517 = vsub.s32 0, %v516
    %v518 = vrot.slane %v503, %v517
    %v519 = vlaneseq
    %v520 = vshrl.u32 %v519, 7
    %v521 = vsub.s32 0, %v520
    %v522 = vrot.slane %v505, %v521
    %v523 = vlaneseq
    %v524 = vshrl.u32 %v523, 7
    %v525 = vsub.s32 0, %v524
    %v526 = vrot.slane %v488, %v525
    %v527 = vlaneseq
    %v528 = vshrl.u32 %v527, 7
    %v529 = vsub.s32 0, %v528
    %v530 = vrot.slane %v502, %v529
    %v531 = vlaneseq
    %v532 = vshrl.u32 %v531, 7
    %v533 = vsub.s32 0, %v532
    %v534 = vrot.slane %v504, %v533
    %v535 = vlaneseq
    %v536 = vshrl.u32 %v535, 7
    %v537 = vsub.s32 0, %v536
    %v538 = vrot.slane %v506, %v537
    %v547 = vmul.f32 %v279, %v510
    %v548 = vmul.f32 %v282, %v514
    %v549 = vmul.f32 %v287, %v518
    %v550 = vmul.f32 %v290, %v522
    %v551 = vmul.f32 %v295, %v526
    %v552 = vmul.f32 %v298, %v530
    %v553 = vmul.f32 %v303, %v534
    %v554 = vmul.f32 %v306, %v538
    %vm555 = vcmask 130048
    %v556 = vsel %vm555, %v547, 0.0
    %557 = vadd.xlane.f32.xlu0 %v556
    %v558 = vpop.xlane.xlu0 %557
    %v559 = vsel %vm555, %v548, 0.0
    %560 = vadd.xlane.f32.xlu0 %v559
    %v561 = vpop.xlane.xlu0 %560
    %v562 = vsel %vm555, %v549, 0.0
    %563 = vadd.xlane.f32.xlu0 %v562
    %v564 = vpop.xlane.xlu0 %563
    %v565 = vsel %vm555, %v550, 0.0
    %566 = vadd.xlane.f32.xlu0 %v565
    %v567 = vpop.xlane.xlu0 %566
    %v568 = vsel %vm555, %v551, 0.0
    %569 = vadd.xlane.f32.xlu0 %v568
    %v570 = vpop.xlane.xlu0 %569
    %v571 = vsel %vm555, %v552, 0.0
    %572 = vadd.xlane.f32.xlu0 %v571
    %v573 = vpop.xlane.xlu0 %572
    %v574 = vsel %vm555, %v553, 0.0
    %575 = vadd.xlane.f32.xlu0 %v574
    %v576 = vpop.xlane.xlu0 %575
    %v577 = vsel %vm555, %v554, 0.0
    %578 = vadd.xlane.f32.xlu0 %v577
    %v579 = vpop.xlane.xlu0 %578
    %v580 = vlaneseq
    %v581 = vand.u32 %v580, 127
    %vm582 = vcmp.eq.s32.totalorder %v581, 0
    %v591 = vlaneseq
    %v592 = vshrl.u32 %v591, 7
    %v593 = vsub.s32 %v581, %v592
    %v594 = vrot.slane %v558, %v593
    %v595 = vlaneseq
    %v596 = vshrl.u32 %v595, 7
    %v597 = vsub.s32 %v581, %v596
    %v598 = vrot.slane %v561, %v597
    %v599 = vlaneseq
    %v600 = vshrl.u32 %v599, 7
    %v601 = vsub.s32 %v581, %v600
    %v602 = vrot.slane %v564, %v601
    %v603 = vlaneseq
    %v604 = vshrl.u32 %v603, 7
    %v605 = vsub.s32 %v581, %v604
    %v606 = vrot.slane %v567, %v605
    %v607 = vlaneseq
    %v608 = vshrl.u32 %v607, 7
    %v609 = vsub.s32 %v581, %v608
    %v610 = vrot.slane %v570, %v609
    %v611 = vlaneseq
    %v612 = vshrl.u32 %v611, 7
    %v613 = vsub.s32 %v581, %v612
    %v614 = vrot.slane %v573, %v613
    %v615 = vlaneseq
    %v616 = vshrl.u32 %v615, 7
    %v617 = vsub.s32 %v581, %v616
    %v618 = vrot.slane %v576, %v617
    %v619 = vlaneseq
    %v620 = vshrl.u32 %v619, 7
    %v621 = vsub.s32 %v581, %v620
    %v622 = vrot.slane %v579, %v621
    %vm623 = vcmask 1041409
    %v624 = vsel %vm623, %v598, %v594
    %vm625 = vcmask 1042434
    %v626 = vsel %vm625, %v602, %v624
    %vm627 = vcmask 1043459
    %v628 = vsel %vm627, %v606, %v626
    %vm629 = vcmask 1044484
    %v630 = vsel %vm629, %v610, %v628
    %vm631 = vcmask 1045509
    %v632 = vsel %vm631, %v614, %v630
    %vm633 = vcmask 1046534
    %v634 = vsel %vm633, %v618, %v632
    %vm635 = vcmask 1047559
    %v636 = vsel %vm635, %v622, %v634
    %v638 = vsel %vm582, %v636, 0.0
    %vm639 = vcmask 64512
    %v640 = vsel %vm639, %v638, 0.0
    %641 = vadd.xlane.f32.xlu0 %v640
    %v642 = vpop.xlane.xlu0 %641
    %v643 = vsub.f32 0.0, %v642
    %v644 = vmax.f32 %v643, 0.0
    %v645 = vand.u32 2147483647, %v642
    %v646 = vsub.f32 0.0, %v645
    %v647 = vmul.f32 %v646, 1.442695
    %v648 = vpow.pop %v647
    %v649 = vadd.f32 %v648, 1.0
    %v650 = vlog2.pop %v649
    %v651 = vmul.f32 %v650, 0.6931472
    %v652 = vmul.f32 -0.5, %v648
    %v653 = vadd.f32 %v652, 1.0
    %v654 = vmul.f32 %v653, %v648
    %v655 = vand.u32 2147483647, %v648
    %vm656 = vcmp.lt.f32.partialorder %v655, 0.0004427343
    %v657 = vsel %vm656, %v654, %v651
    %v658 = vadd.f32 %v644, %v657
    %v659 = vsub.f32 0.0, %v658
    %v660 = vsub.f32 0.0, %v659
    %v661 = vsub.f32 0.0, %v558
    %v662 = vsub.f32 0.0, %v561
    %v663 = vsub.f32 0.0, %v564
    %v664 = vsub.f32 0.0, %v567
    %v665 = vsub.f32 0.0, %v570
    %v666 = vsub.f32 0.0, %v573
    %v667 = vsub.f32 0.0, %v576
    %v668 = vsub.f32 0.0, %v579
    %v669 = vsub.f32 0.0, %v661
    %v670 = vsub.f32 0.0, %v662
    %v671 = vsub.f32 0.0, %v663
    %v672 = vsub.f32 0.0, %v664
    %v673 = vsub.f32 0.0, %v665
    %v674 = vsub.f32 0.0, %v666
    %v675 = vsub.f32 0.0, %v667
    %v676 = vsub.f32 0.0, %v668
    %v677 = vmax.f32 %v669, 0.0
    %v678 = vmax.f32 %v670, 0.0
    %v679 = vmax.f32 %v671, 0.0
    %v680 = vmax.f32 %v672, 0.0
    %v681 = vmax.f32 %v673, 0.0
    %v682 = vmax.f32 %v674, 0.0
    %v683 = vmax.f32 %v675, 0.0
    %v684 = vmax.f32 %v676, 0.0
    %v685 = vand.u32 2147483647, %v661
    %v686 = vand.u32 2147483647, %v662
    %v687 = vand.u32 2147483647, %v663
    %v688 = vand.u32 2147483647, %v664
    %v689 = vand.u32 2147483647, %v665
    %v690 = vand.u32 2147483647, %v666
    %v691 = vand.u32 2147483647, %v667
    %v692 = vand.u32 2147483647, %v668
    %v693 = vsub.f32 0.0, %v685
    %v694 = vsub.f32 0.0, %v686
    %v695 = vsub.f32 0.0, %v687
    %v696 = vsub.f32 0.0, %v688
    %v697 = vsub.f32 0.0, %v689
    %v698 = vsub.f32 0.0, %v690
    %v699 = vsub.f32 0.0, %v691
    %v700 = vsub.f32 0.0, %v692
    %v701 = vmul.f32 %v693, 1.442695
    %v702 = vpow.pop %v701
    %v703 = vmul.f32 %v694, 1.442695
    %v704 = vpow.pop %v703
    %v705 = vmul.f32 %v695, 1.442695
    %v706 = vpow.pop %v705
    %v707 = vmul.f32 %v696, 1.442695
    %v708 = vpow.pop %v707
    %v709 = vmul.f32 %v697, 1.442695
    %v710 = vpow.pop %v709
    %v711 = vmul.f32 %v698, 1.442695
    %v712 = vpow.pop %v711
    %v713 = vmul.f32 %v699, 1.442695
    %v714 = vpow.pop %v713
    %v715 = vmul.f32 %v700, 1.442695
    %v716 = vpow.pop %v715
    %v717 = vadd.f32 %v702, 1.0
    %v718 = vlog2.pop %v717
    %v719 = vmul.f32 %v718, 0.6931472
    %v720 = vmul.f32 -0.5, %v702
    %v721 = vadd.f32 %v720, 1.0
    %v722 = vmul.f32 %v721, %v702
    %v723 = vand.u32 2147483647, %v702
    %vm724 = vcmp.lt.f32.partialorder %v723, 0.0004427343
    %v725 = vsel %vm724, %v722, %v719
    %v726 = vadd.f32 %v704, 1.0
    %v727 = vlog2.pop %v726
    %v728 = vmul.f32 %v727, 0.6931472
    %v729 = vmul.f32 -0.5, %v704
    %v730 = vadd.f32 %v729, 1.0
    %v731 = vmul.f32 %v730, %v704
    %v732 = vand.u32 2147483647, %v704
    %vm733 = vcmp.lt.f32.partialorder %v732, 0.0004427343
    %v734 = vsel %vm733, %v731, %v728
    %v735 = vadd.f32 %v706, 1.0
    %v736 = vlog2.pop %v735
    %v737 = vmul.f32 %v736, 0.6931472
    %v738 = vmul.f32 -0.5, %v706
    %v739 = vadd.f32 %v738, 1.0
    %v740 = vmul.f32 %v739, %v706
    %v741 = vand.u32 2147483647, %v706
    %vm742 = vcmp.lt.f32.partialorder %v741, 0.0004427343
    %v743 = vsel %vm742, %v740, %v737
    %v744 = vadd.f32 %v708, 1.0
    %v745 = vlog2.pop %v744
    %v746 = vmul.f32 %v745, 0.6931472
    %v747 = vmul.f32 -0.5, %v708
    %v748 = vadd.f32 %v747, 1.0
    %v749 = vmul.f32 %v748, %v708
    %v750 = vand.u32 2147483647, %v708
    %vm751 = vcmp.lt.f32.partialorder %v750, 0.0004427343
    %v752 = vsel %vm751, %v749, %v746
    %v753 = vadd.f32 %v710, 1.0
    %v754 = vlog2.pop %v753
    %v755 = vmul.f32 %v754, 0.6931472
    %v756 = vmul.f32 -0.5, %v710
    %v757 = vadd.f32 %v756, 1.0
    %v758 = vmul.f32 %v757, %v710
    %v759 = vand.u32 2147483647, %v710
    %vm760 = vcmp.lt.f32.partialorder %v759, 0.0004427343
    %v761 = vsel %vm760, %v758, %v755
    %v762 = vadd.f32 %v712, 1.0
    %v763 = vlog2.pop %v762
    %v764 = vmul.f32 %v763, 0.6931472
    %v765 = vmul.f32 -0.5, %v712
    %v766 = vadd.f32 %v765, 1.0
    %v767 = vmul.f32 %v766, %v712
    %v768 = vand.u32 2147483647, %v712
    %vm769 = vcmp.lt.f32.partialorder %v768, 0.0004427343
    %v770 = vsel %vm769, %v767, %v764
    %v771 = vadd.f32 %v714, 1.0
    %v772 = vlog2.pop %v771
    %v773 = vmul.f32 %v772, 0.6931472
    %v774 = vmul.f32 -0.5, %v714
    %v775 = vadd.f32 %v774, 1.0
    %v776 = vmul.f32 %v775, %v714
    %v777 = vand.u32 2147483647, %v714
    %vm778 = vcmp.lt.f32.partialorder %v777, 0.0004427343
    %v779 = vsel %vm778, %v776, %v773
    %v780 = vadd.f32 %v716, 1.0
    %v781 = vlog2.pop %v780
    %v782 = vmul.f32 %v781, 0.6931472
    %v783 = vmul.f32 -0.5, %v716
    %v784 = vadd.f32 %v783, 1.0
    %v785 = vmul.f32 %v784, %v716
    %v786 = vand.u32 2147483647, %v716
    %vm787 = vcmp.lt.f32.partialorder %v786, 0.0004427343
    %v788 = vsel %vm787, %v785, %v782
    %v789 = vadd.f32 %v677, %v725
    %v790 = vadd.f32 %v678, %v734
    %v791 = vadd.f32 %v679, %v743
    %v792 = vadd.f32 %v680, %v752
    %v793 = vadd.f32 %v681, %v761
    %v794 = vadd.f32 %v682, %v770
    %v795 = vadd.f32 %v683, %v779
    %v796 = vadd.f32 %v684, %v788
    %v797 = vsub.f32 0.0, %v789
    %v798 = vsub.f32 0.0, %v790
    %v799 = vsub.f32 0.0, %v791
    %v800 = vsub.f32 0.0, %v792
    %v801 = vsub.f32 0.0, %v793
    %v802 = vsub.f32 0.0, %v794
    %v803 = vsub.f32 0.0, %v795
    %v804 = vsub.f32 0.0, %v796
    %v813 = vlaneseq
    %v814 = vshrl.u32 %v813, 7
    %v815 = vsub.s32 %v581, %v814
    %v816 = vrot.slane %v797, %v815
    %v817 = vlaneseq
    %v818 = vshrl.u32 %v817, 7
    %v819 = vsub.s32 %v581, %v818
    %v820 = vrot.slane %v798, %v819
    %v821 = vlaneseq
    %v822 = vshrl.u32 %v821, 7
    %v823 = vsub.s32 %v581, %v822
    %v824 = vrot.slane %v799, %v823
    %v825 = vlaneseq
    %v826 = vshrl.u32 %v825, 7
    %v827 = vsub.s32 %v581, %v826
    %v828 = vrot.slane %v800, %v827
    %v829 = vlaneseq
    %v830 = vshrl.u32 %v829, 7
    %v831 = vsub.s32 %v581, %v830
    %v832 = vrot.slane %v801, %v831
    %v833 = vlaneseq
    %v834 = vshrl.u32 %v833, 7
    %v835 = vsub.s32 %v581, %v834
    %v836 = vrot.slane %v802, %v835
    %v837 = vlaneseq
    %v838 = vshrl.u32 %v837, 7
    %v839 = vsub.s32 %v581, %v838
    %v840 = vrot.slane %v803, %v839
    %v841 = vlaneseq
    %v842 = vshrl.u32 %v841, 7
    %v843 = vsub.s32 %v581, %v842
    %v844 = vrot.slane %v804, %v843
    %v845 = vsel %vm623, %v820, %v816
    %v846 = vsel %vm625, %v824, %v845
    %v847 = vsel %vm627, %v828, %v846
    %v848 = vsel %vm629, %v832, %v847
    %v849 = vsel %vm631, %v836, %v848
    %v850 = vsel %vm633, %v840, %v849
    %v851 = vsel %vm635, %v844, %v850
    %v853 = vsel %vm582, 0.0, %v851
    %v854 = vsel %vm639, %v853, 0.0
    %855 = vadd.xlane.f32.xlu0 %v854
    %v856 = vpop.xlane.xlu0 %855
    %v857 = vsub.f32 0.0, %v856
    %v858 = vrcp.pop 7.0
    %v859 = vmul.f32 %v857, %v858
    %v860 = vsub.f32 %v162, %v558
    %v861 = vsub.f32 %v165, %v561
    %v862 = vsub.f32 %v168, %v564
    %v863 = vsub.f32 %v171, %v567
    %v864 = vsub.f32 %v174, %v570
    %v865 = vsub.f32 %v177, %v573
    %v866 = vsub.f32 %v180, %v576
    %v867 = vsub.f32 %v183, %v579
    %v868 = vmul.f32 %v860, %v860
    %v869 = vmul.f32 %v861, %v861
    %v870 = vmul.f32 %v862, %v862
    %v871 = vmul.f32 %v863, %v863
    %v872 = vmul.f32 %v864, %v864
    %v873 = vmul.f32 %v865, %v865
    %v874 = vmul.f32 %v866, %v866
    %v875 = vmul.f32 %v867, %v867
    %v884 = vlaneseq
    %v885 = vshrl.u32 %v884, 7
    %v886 = vsub.s32 %v581, %v885
    %v887 = vrot.slane %v868, %v886
    %v888 = vlaneseq
    %v889 = vshrl.u32 %v888, 7
    %v890 = vsub.s32 %v581, %v889
    %v891 = vrot.slane %v869, %v890
    %v892 = vlaneseq
    %v893 = vshrl.u32 %v892, 7
    %v894 = vsub.s32 %v581, %v893
    %v895 = vrot.slane %v870, %v894
    %v896 = vlaneseq
    %v897 = vshrl.u32 %v896, 7
    %v898 = vsub.s32 %v581, %v897
    %v899 = vrot.slane %v871, %v898
    %v900 = vlaneseq
    %v901 = vshrl.u32 %v900, 7
    %v902 = vsub.s32 %v581, %v901
    %v903 = vrot.slane %v872, %v902
    %v904 = vlaneseq
    %v905 = vshrl.u32 %v904, 7
    %v906 = vsub.s32 %v581, %v905
    %v907 = vrot.slane %v873, %v906
    %v908 = vlaneseq
    %v909 = vshrl.u32 %v908, 7
    %v910 = vsub.s32 %v581, %v909
    %v911 = vrot.slane %v874, %v910
    %v912 = vlaneseq
    %v913 = vshrl.u32 %v912, 7
    %v914 = vsub.s32 %v581, %v913
    %v915 = vrot.slane %v875, %v914
    %v916 = vsel %vm623, %v891, %v887
    %v917 = vsel %vm625, %v895, %v916
    %v918 = vsel %vm627, %v899, %v917
    %v919 = vsel %vm629, %v903, %v918
    %v920 = vsel %vm631, %v907, %v919
    %v921 = vsel %vm633, %v911, %v920
    %v922 = vsel %vm635, %v915, %v921
    %v924 = vsel %vm639, %v922, 0.0
    %925 = vadd.xlane.f32.xlu0 %v924
    %v926 = vpop.xlane.xlu0 %925
    %v927 = vrcp.pop 8.0
    %v928 = vmul.f32 %v926, %v927
    %v929 = vmul.f32 %v279, %v279
    %v930 = vmul.f32 %v282, %v282
    %v931 = vmul.f32 %v287, %v287
    %v932 = vmul.f32 %v290, %v290
    %v933 = vmul.f32 %v295, %v295
    %v934 = vmul.f32 %v298, %v298
    %v935 = vmul.f32 %v303, %v303
    %v936 = vmul.f32 %v306, %v306
    %v937 = vsel %vm555, %v929, 0.0
    %938 = vadd.xlane.f32.xlu0 %v937
    %v939 = vpop.xlane.xlu0 %938
    %v940 = vsel %vm555, %v930, 0.0
    %941 = vadd.xlane.f32.xlu0 %v940
    %v942 = vpop.xlane.xlu0 %941
    %v943 = vsel %vm555, %v931, 0.0
    %944 = vadd.xlane.f32.xlu0 %v943
    %v945 = vpop.xlane.xlu0 %944
    %v946 = vsel %vm555, %v932, 0.0
    %947 = vadd.xlane.f32.xlu0 %v946
    %v948 = vpop.xlane.xlu0 %947
    %v949 = vsel %vm555, %v933, 0.0
    %950 = vadd.xlane.f32.xlu0 %v949
    %v951 = vpop.xlane.xlu0 %950
    %v952 = vsel %vm555, %v934, 0.0
    %953 = vadd.xlane.f32.xlu0 %v952
    %v954 = vpop.xlane.xlu0 %953
    %v955 = vsel %vm555, %v935, 0.0
    %956 = vadd.xlane.f32.xlu0 %v955
    %v957 = vpop.xlane.xlu0 %956
    %v958 = vsel %vm555, %v936, 0.0
    %959 = vadd.xlane.f32.xlu0 %v958
    %v960 = vpop.xlane.xlu0 %959
    %v961 = vadd.f32 %v939, 1e-06
    %v962 = vadd.f32 %v942, 1e-06
    %v963 = vadd.f32 %v945, 1e-06
    %v964 = vadd.f32 %v948, 1e-06
    %v965 = vadd.f32 %v951, 1e-06
    %v966 = vadd.f32 %v954, 1e-06
    %v967 = vadd.f32 %v957, 1e-06
    %v968 = vadd.f32 %v960, 1e-06
    %v969 = vrsqrt.pop %v961
    %v970 = vrsqrt.pop %v962
    %v971 = vrsqrt.pop %v963
    %v972 = vrsqrt.pop %v964
    %v973 = vrsqrt.pop %v965
    %v974 = vrsqrt.pop %v966
    %v975 = vrsqrt.pop %v967
    %v976 = vrsqrt.pop %v968
    %v977 = vmul.f32 %v279, %v969
    %v978 = vmul.f32 %v282, %v970
    %v979 = vmul.f32 %v287, %v971
    %v980 = vmul.f32 %v290, %v972
    %v981 = vmul.f32 %v295, %v973
    %v982 = vmul.f32 %v298, %v974
    %v983 = vmul.f32 %v303, %v975
    %v984 = vmul.f32 %v306, %v976
    %v985 = vmul.f32 %v451, %v451
    %v986 = vsel %vm555, %v985, 0.0
    %987 = vadd.xlane.f32.xlu0 %v986
    %v988 = vpop.xlane.xlu0 %987
    %v989 = vadd.f32 %v988, 1e-06
    %v990 = vrsqrt.pop %v989
    %v991 = vmul.f32 %v451, %v990
    %v993 = vcombine.high %v991, %v991
    %v995 = vunpack.c.l.s4 1966171168
    %v996 = vunpack.c.0.s8 %v995
    %v997 = vlaneseq
    %v998 = vshrl.u32 %v997, 7
    %v999 = vsub.s32 %v996, %v998
    %v1000 = vrot.slane %v991, %v999
    %v1002 = vunpack.c.l.s4 1966171168
    %v1003 = vunpack.c.0.s8 %v1002
    %v1004 = vlaneseq
    %v1005 = vshrl.u32 %v1004, 7
    %v1006 = vsub.s32 %v1003, %v1005
    %v1007 = vrot.slane %v993, %v1006
    %v1008 = vcombine.high %v1000, %v1000
    %v1009 = vcombine.high %v1007, %v1007
    %v1011 = vunpack.c.l.s4 1966171168
    %v1012 = vunpack.c.0.s8 %v1011
    %v1013 = vlaneseq
    %v1014 = vshrl.u32 %v1013, 7
    %v1015 = vsub.s32 %v1012, %v1014
    %v1016 = vrot.slane %v1000, %v1015
    %v1018 = vunpack.c.l.s4 1966171168
    %v1019 = vunpack.c.0.s8 %v1018
    %v1020 = vlaneseq
    %v1021 = vshrl.u32 %v1020, 7
    %v1022 = vsub.s32 %v1019, %v1021
    %v1023 = vrot.slane %v1007, %v1022
    %v1025 = vunpack.c.l.s4 1966171168
    %v1026 = vunpack.c.0.s8 %v1025
    %v1027 = vlaneseq
    %v1028 = vshrl.u32 %v1027, 7
    %v1029 = vsub.s32 %v1026, %v1028
    %v1030 = vrot.slane %v1008, %v1029
    %v1032 = vunpack.c.l.s4 1966171168
    %v1033 = vunpack.c.0.s8 %v1032
    %v1034 = vlaneseq
    %v1035 = vshrl.u32 %v1034, 7
    %v1036 = vsub.s32 %v1033, %v1035
    %v1037 = vrot.slane %v1009, %v1036
    %v1038 = vcombine.high %v1016, %v1016
    %v1039 = vcombine.high %v1023, %v1023
    %v1040 = vcombine.high %v1030, %v1030
    %v1041 = vcombine.high %v1037, %v1037
    %v1050 = vmul.f32 %v977, %v1016
    %v1051 = vmul.f32 %v978, %v1030
    %v1052 = vmul.f32 %v979, %v1038
    %v1053 = vmul.f32 %v980, %v1040
    %v1054 = vmul.f32 %v981, %v1023
    %v1055 = vmul.f32 %v982, %v1037
    %v1056 = vmul.f32 %v983, %v1039
    %v1057 = vmul.f32 %v984, %v1041
    %vm1058 = vcmask 122880
    %v1059 = vsel %vm1058, %v1050, 0.0
    %1060 = vadd.xlane.f32.xlu0 %v1059
    %v1061 = vpop.xlane.xlu0 %1060
    %v1062 = vsel %vm1058, %v1051, 0.0
    %1063 = vadd.xlane.f32.xlu0 %v1062
    %v1064 = vpop.xlane.xlu0 %1063
    %v1065 = vsel %vm1058, %v1052, 0.0
    %1066 = vadd.xlane.f32.xlu0 %v1065
    %v1067 = vpop.xlane.xlu0 %1066
    %v1068 = vsel %vm1058, %v1053, 0.0
    %1069 = vadd.xlane.f32.xlu0 %v1068
    %v1070 = vpop.xlane.xlu0 %1069
    %v1071 = vsel %vm1058, %v1054, 0.0
    %1072 = vadd.xlane.f32.xlu0 %v1071
    %v1073 = vpop.xlane.xlu0 %1072
    %v1074 = vsel %vm1058, %v1055, 0.0
    %1075 = vadd.xlane.f32.xlu0 %v1074
    %v1076 = vpop.xlane.xlu0 %1075
    %v1077 = vsel %vm1058, %v1056, 0.0
    %1078 = vadd.xlane.f32.xlu0 %v1077
    %v1079 = vpop.xlane.xlu0 %1078
    %v1080 = vsel %vm1058, %v1057, 0.0
    %1081 = vadd.xlane.f32.xlu0 %v1080
    %v1082 = vpop.xlane.xlu0 %1081
    %v1083 = vmul.f32 %v1061, 2.0
    %v1084 = vmul.f32 %v1064, 2.0
    %v1085 = vmul.f32 %v1067, 2.0
    %v1086 = vmul.f32 %v1070, 2.0
    %v1087 = vmul.f32 %v1073, 2.0
    %v1088 = vmul.f32 %v1076, 2.0
    %v1089 = vmul.f32 %v1079, 2.0
    %v1090 = vmul.f32 %v1082, 2.0
    %v1091 = vlaneseq
    %v1092 = vshrl.u32 %v1091, 7
    %v1093 = vsub.s32 0, %v1092
    %v1094 = vrot.slane %v977, %v1093
    %v1095 = vlaneseq
    %v1096 = vshrl.u32 %v1095, 7
    %v1097 = vsub.s32 0, %v1096
    %v1098 = vrot.slane %v978, %v1097
    %v1099 = vlaneseq
    %v1100 = vshrl.u32 %v1099, 7
    %v1101 = vsub.s32 0, %v1100
    %v1102 = vrot.slane %v979, %v1101
    %v1103 = vlaneseq
    %v1104 = vshrl.u32 %v1103, 7
    %v1105 = vsub.s32 0, %v1104
    %v1106 = vrot.slane %v980, %v1105
    %v1107 = vlaneseq
    %v1108 = vshrl.u32 %v1107, 7
    %v1109 = vsub.s32 0, %v1108
    %v1110 = vrot.slane %v981, %v1109
    %v1111 = vlaneseq
    %v1112 = vshrl.u32 %v1111, 7
    %v1113 = vsub.s32 0, %v1112
    %v1114 = vrot.slane %v982, %v1113
    %v1115 = vlaneseq
    %v1116 = vshrl.u32 %v1115, 7
    %v1117 = vsub.s32 0, %v1116
    %v1118 = vrot.slane %v983, %v1117
    %v1119 = vlaneseq
    %v1120 = vshrl.u32 %v1119, 7
    %v1121 = vsub.s32 0, %v1120
    %v1122 = vrot.slane %v984, %v1121
    %v1123 = vmul.f32 %v1094, %v977
    %v1124 = vmul.f32 %v1098, %v978
    %v1125 = vmul.f32 %v1102, %v979
    %v1126 = vmul.f32 %v1106, %v980
    %v1127 = vmul.f32 %v1110, %v981
    %v1128 = vmul.f32 %v1114, %v982
    %v1129 = vmul.f32 %v1118, %v983
    %v1130 = vmul.f32 %v1122, %v984
    %v1131 = vsel %vm555, %v1123, 0.0
    %1132 = vadd.xlane.f32.xlu0 %v1131
    %v1133 = vpop.xlane.xlu0 %1132
    %v1134 = vsel %vm555, %v1124, 0.0
    %1135 = vadd.xlane.f32.xlu0 %v1134
    %v1136 = vpop.xlane.xlu0 %1135
    %v1137 = vsel %vm555, %v1125, 0.0
    %1138 = vadd.xlane.f32.xlu0 %v1137
    %v1139 = vpop.xlane.xlu0 %1138
    %v1140 = vsel %vm555, %v1126, 0.0
    %1141 = vadd.xlane.f32.xlu0 %v1140
    %v1142 = vpop.xlane.xlu0 %1141
    %v1143 = vsel %vm555, %v1127, 0.0
    %1144 = vadd.xlane.f32.xlu0 %v1143
    %v1145 = vpop.xlane.xlu0 %1144
    %v1146 = vsel %vm555, %v1128, 0.0
    %1147 = vadd.xlane.f32.xlu0 %v1146
    %v1148 = vpop.xlane.xlu0 %1147
    %v1149 = vsel %vm555, %v1129, 0.0
    %1150 = vadd.xlane.f32.xlu0 %v1149
    %v1151 = vpop.xlane.xlu0 %1150
    %v1152 = vsel %vm555, %v1130, 0.0
    %1153 = vadd.xlane.f32.xlu0 %v1152
    %v1154 = vpop.xlane.xlu0 %1153
    %v1155 = vmul.f32 %v1133, 2.0
    %v1156 = vmul.f32 %v1136, 2.0
    %v1157 = vmul.f32 %v1139, 2.0
    %v1158 = vmul.f32 %v1142, 2.0
    %v1159 = vmul.f32 %v1145, 2.0
    %v1160 = vmul.f32 %v1148, 2.0
    %v1161 = vmul.f32 %v1151, 2.0
    %v1162 = vmul.f32 %v1154, 2.0
    %vm1163 = vcmp.ne.s32.totalorder %v581, 0
    %v1172 = vlaneseq
    %v1173 = vshrl.u32 %v1172, 7
    %v1174 = vsub.s32 %v581, %v1173
    %v1175 = vrot.slane %v1155, %v1174
    %v1176 = vlaneseq
    %v1177 = vshrl.u32 %v1176, 7
    %v1178 = vsub.s32 %v581, %v1177
    %v1179 = vrot.slane %v1156, %v1178
    %v1180 = vlaneseq
    %v1181 = vshrl.u32 %v1180, 7
    %v1182 = vsub.s32 %v581, %v1181
    %v1183 = vrot.slane %v1157, %v1182
    %v1184 = vlaneseq
    %v1185 = vshrl.u32 %v1184, 7
    %v1186 = vsub.s32 %v581, %v1185
    %v1187 = vrot.slane %v1158, %v1186
    %v1188 = vlaneseq
    %v1189 = vshrl.u32 %v1188, 7
    %v1190 = vsub.s32 %v581, %v1189
    %v1191 = vrot.slane %v1159, %v1190
    %v1192 = vlaneseq
    %v1193 = vshrl.u32 %v1192, 7
    %v1194 = vsub.s32 %v581, %v1193
    %v1195 = vrot.slane %v1160, %v1194
    %v1196 = vlaneseq
    %v1197 = vshrl.u32 %v1196, 7
    %v1198 = vsub.s32 %v581, %v1197
    %v1199 = vrot.slane %v1161, %v1198
    %v1200 = vlaneseq
    %v1201 = vshrl.u32 %v1200, 7
    %v1202 = vsub.s32 %v581, %v1201
    %v1203 = vrot.slane %v1162, %v1202
    %v1204 = vsel %vm623, %v1179, %v1175
    %v1205 = vsel %vm625, %v1183, %v1204
    %v1206 = vsel %vm627, %v1187, %v1205
    %v1207 = vsel %vm629, %v1191, %v1206
    %v1208 = vsel %vm631, %v1195, %v1207
    %v1209 = vsel %vm633, %v1199, %v1208
    %v1210 = vsel %vm635, %v1203, %v1209
    %v1212 = vsel %vm1163, %v1210, -1e+30
    %v1213 = vsel %vm639, %v1212, -inf
    %1214 = vmax.xlane.f32.xlu0 %v1213
    %v1215 = vpop.xlane.xlu0 %1214
    %v1217 = vlaneseq
    %v1218 = vshrl.u32 %v1217, 7
    %v1219 = vsub.s32 0, %v1218
    %v1220 = vrot.slane %v1215, %v1219
    %v1221 = vlaneseq
    %v1222 = vshrl.u32 %v1221, 7
    %v1223 = vsub.s32 1, %v1222
    %v1224 = vrot.slane %v1215, %v1223
    %v1225 = vlaneseq
    %v1226 = vshrl.u32 %v1225, 7
    %v1227 = vsub.s32 2, %v1226
    %v1228 = vrot.slane %v1215, %v1227
    %v1229 = vlaneseq
    %v1230 = vshrl.u32 %v1229, 7
    %v1231 = vsub.s32 3, %v1230
    %v1232 = vrot.slane %v1215, %v1231
    %v1233 = vlaneseq
    %v1234 = vshrl.u32 %v1233, 7
    %v1235 = vsub.s32 4, %v1234
    %v1236 = vrot.slane %v1215, %v1235
    %v1237 = vlaneseq
    %v1238 = vshrl.u32 %v1237, 7
    %v1239 = vsub.s32 5, %v1238
    %v1240 = vrot.slane %v1215, %v1239
    %v1241 = vlaneseq
    %v1242 = vshrl.u32 %v1241, 7
    %v1243 = vsub.s32 6, %v1242
    %v1244 = vrot.slane %v1215, %v1243
    %v1245 = vlaneseq
    %v1246 = vshrl.u32 %v1245, 7
    %v1247 = vsub.s32 7, %v1246
    %v1248 = vrot.slane %v1215, %v1247
    %v1257 = vmax.f32 %v1083, %v1220
    %v1258 = vmax.f32 %v1084, %v1224
    %v1259 = vmax.f32 %v1085, %v1228
    %v1260 = vmax.f32 %v1086, %v1232
    %v1261 = vmax.f32 %v1087, %v1236
    %v1262 = vmax.f32 %v1088, %v1240
    %v1263 = vmax.f32 %v1089, %v1244
    %v1264 = vmax.f32 %v1090, %v1248
    %v1265 = vsub.f32 %v1083, %v1257
    %v1266 = vsub.f32 %v1084, %v1258
    %v1267 = vsub.f32 %v1085, %v1259
    %v1268 = vsub.f32 %v1086, %v1260
    %v1269 = vsub.f32 %v1087, %v1261
    %v1270 = vsub.f32 %v1088, %v1262
    %v1271 = vsub.f32 %v1089, %v1263
    %v1272 = vsub.f32 %v1090, %v1264
    %v1273 = vmul.f32 %v1265, 1.442695
    %v1274 = vpow.pop %v1273
    %v1275 = vmul.f32 %v1266, 1.442695
    %v1276 = vpow.pop %v1275
    %v1277 = vmul.f32 %v1267, 1.442695
    %v1278 = vpow.pop %v1277
    %v1279 = vmul.f32 %v1268, 1.442695
    %v1280 = vpow.pop %v1279
    %v1281 = vmul.f32 %v1269, 1.442695
    %v1282 = vpow.pop %v1281
    %v1283 = vmul.f32 %v1270, 1.442695
    %v1284 = vpow.pop %v1283
    %v1285 = vmul.f32 %v1271, 1.442695
    %v1286 = vpow.pop %v1285
    %v1287 = vmul.f32 %v1272, 1.442695
    %v1288 = vpow.pop %v1287
    %v1289 = vlaneseq
    %v1290 = vshrl.u32 %v1289, 7
    %v1291 = vsub.s32 0, %v1290
    %v1292 = vrot.slane %v1257, %v1291
    %v1293 = vlaneseq
    %v1294 = vshrl.u32 %v1293, 7
    %v1295 = vsub.s32 0, %v1294
    %v1296 = vrot.slane %v1258, %v1295
    %v1297 = vlaneseq
    %v1298 = vshrl.u32 %v1297, 7
    %v1299 = vsub.s32 0, %v1298
    %v1300 = vrot.slane %v1259, %v1299
    %v1301 = vlaneseq
    %v1302 = vshrl.u32 %v1301, 7
    %v1303 = vsub.s32 0, %v1302
    %v1304 = vrot.slane %v1260, %v1303
    %v1305 = vlaneseq
    %v1306 = vshrl.u32 %v1305, 7
    %v1307 = vsub.s32 0, %v1306
    %v1308 = vrot.slane %v1261, %v1307
    %v1309 = vlaneseq
    %v1310 = vshrl.u32 %v1309, 7
    %v1311 = vsub.s32 0, %v1310
    %v1312 = vrot.slane %v1262, %v1311
    %v1313 = vlaneseq
    %v1314 = vshrl.u32 %v1313, 7
    %v1315 = vsub.s32 0, %v1314
    %v1316 = vrot.slane %v1263, %v1315
    %v1317 = vlaneseq
    %v1318 = vshrl.u32 %v1317, 7
    %v1319 = vsub.s32 0, %v1318
    %v1320 = vrot.slane %v1264, %v1319
    %v1321 = vsub.f32 %v1155, %v1292
    %v1322 = vsub.f32 %v1156, %v1296
    %v1323 = vsub.f32 %v1157, %v1300
    %v1324 = vsub.f32 %v1158, %v1304
    %v1325 = vsub.f32 %v1159, %v1308
    %v1326 = vsub.f32 %v1160, %v1312
    %v1327 = vsub.f32 %v1161, %v1316
    %v1328 = vsub.f32 %v1162, %v1320
    %v1329 = vmul.f32 %v1321, 1.442695
    %v1330 = vpow.pop %v1329
    %v1331 = vmul.f32 %v1322, 1.442695
    %v1332 = vpow.pop %v1331
    %v1333 = vmul.f32 %v1323, 1.442695
    %v1334 = vpow.pop %v1333
    %v1335 = vmul.f32 %v1324, 1.442695
    %v1336 = vpow.pop %v1335
    %v1337 = vmul.f32 %v1325, 1.442695
    %v1338 = vpow.pop %v1337
    %v1339 = vmul.f32 %v1326, 1.442695
    %v1340 = vpow.pop %v1339
    %v1341 = vmul.f32 %v1327, 1.442695
    %v1342 = vpow.pop %v1341
    %v1343 = vmul.f32 %v1328, 1.442695
    %v1344 = vpow.pop %v1343
    %1353 = vset.pattern.permute.xlu0 0
    %1354 = vperm.xlu0 %1353, %v1330
    %v1355 = vpop.permute.xlu0 %1354
    %1356 = vset.pattern.permute.xlu0 0
    %1357 = vperm.xlu0 %1356, %v1332
    %v1358 = vpop.permute.xlu0 %1357
    %1359 = vset.pattern.permute.xlu0 0
    %1360 = vperm.xlu0 %1359, %v1334
    %v1361 = vpop.permute.xlu0 %1360
    %1362 = vset.pattern.permute.xlu0 0
    %1363 = vperm.xlu0 %1362, %v1336
    %v1364 = vpop.permute.xlu0 %1363
    %1365 = vset.pattern.permute.xlu0 0
    %1366 = vperm.xlu0 %1365, %v1338
    %v1367 = vpop.permute.xlu0 %1366
    %1368 = vset.pattern.permute.xlu0 0
    %1369 = vperm.xlu0 %1368, %v1340
    %v1370 = vpop.permute.xlu0 %1369
    %1371 = vset.pattern.permute.xlu0 0
    %1372 = vperm.xlu0 %1371, %v1342
    %v1373 = vpop.permute.xlu0 %1372
    %1374 = vset.pattern.permute.xlu0 0
    %1375 = vperm.xlu0 %1374, %v1344
    %v1376 = vpop.permute.xlu0 %1375
    %v1377 = vlaneseq
    %v1378 = vshrl.u32 %v1377, 7
    %v1379 = vsub.s32 %v581, %v1378
    %v1380 = vrot.slane %v1355, %v1379
    %v1381 = vlaneseq
    %v1382 = vshrl.u32 %v1381, 7
    %v1383 = vsub.s32 %v581, %v1382
    %v1384 = vrot.slane %v1358, %v1383
    %v1385 = vlaneseq
    %v1386 = vshrl.u32 %v1385, 7
    %v1387 = vsub.s32 %v581, %v1386
    %v1388 = vrot.slane %v1361, %v1387
    %v1389 = vlaneseq
    %v1390 = vshrl.u32 %v1389, 7
    %v1391 = vsub.s32 %v581, %v1390
    %v1392 = vrot.slane %v1364, %v1391
    %v1393 = vlaneseq
    %v1394 = vshrl.u32 %v1393, 7
    %v1395 = vsub.s32 %v581, %v1394
    %v1396 = vrot.slane %v1367, %v1395
    %v1397 = vlaneseq
    %v1398 = vshrl.u32 %v1397, 7
    %v1399 = vsub.s32 %v581, %v1398
    %v1400 = vrot.slane %v1370, %v1399
    %v1401 = vlaneseq
    %v1402 = vshrl.u32 %v1401, 7
    %v1403 = vsub.s32 %v581, %v1402
    %v1404 = vrot.slane %v1373, %v1403
    %v1405 = vlaneseq
    %v1406 = vshrl.u32 %v1405, 7
    %v1407 = vsub.s32 %v581, %v1406
    %v1408 = vrot.slane %v1376, %v1407
    %v1409 = vsel %vm623, %v1384, %v1380
    %v1410 = vsel %vm625, %v1388, %v1409
    %v1411 = vsel %vm627, %v1392, %v1410
    %v1412 = vsel %vm629, %v1396, %v1411
    %v1413 = vsel %vm631, %v1400, %v1412
    %v1414 = vsel %vm633, %v1404, %v1413
    %v1415 = vsel %vm635, %v1408, %v1414
    %v1417 = vsel %vm1163, %v1415, 0.0
    %v1418 = vsel %vm639, %v1417, 0.0
    %1419 = vadd.xlane.f32.xlu0 %v1418
    %v1420 = vpop.xlane.xlu0 %1419
    %v1422 = vlaneseq
    %v1423 = vshrl.u32 %v1422, 7
    %v1424 = vsub.s32 0, %v1423
    %v1425 = vrot.slane %v1420, %v1424
    %v1426 = vlaneseq
    %v1427 = vshrl.u32 %v1426, 7
    %v1428 = vsub.s32 1, %v1427
    %v1429 = vrot.slane %v1420, %v1428
    %v1430 = vlaneseq
    %v1431 = vshrl.u32 %v1430, 7
    %v1432 = vsub.s32 2, %v1431
    %v1433 = vrot.slane %v1420, %v1432
    %v1434 = vlaneseq
    %v1435 = vshrl.u32 %v1434, 7
    %v1436 = vsub.s32 3, %v1435
    %v1437 = vrot.slane %v1420, %v1436
    %v1438 = vlaneseq
    %v1439 = vshrl.u32 %v1438, 7
    %v1440 = vsub.s32 4, %v1439
    %v1441 = vrot.slane %v1420, %v1440
    %v1442 = vlaneseq
    %v1443 = vshrl.u32 %v1442, 7
    %v1444 = vsub.s32 5, %v1443
    %v1445 = vrot.slane %v1420, %v1444
    %v1446 = vlaneseq
    %v1447 = vshrl.u32 %v1446, 7
    %v1448 = vsub.s32 6, %v1447
    %v1449 = vrot.slane %v1420, %v1448
    %v1450 = vlaneseq
    %v1451 = vshrl.u32 %v1450, 7
    %v1452 = vsub.s32 7, %v1451
    %v1453 = vrot.slane %v1420, %v1452
    %v1462 = vadd.f32 %v1274, %v1425
    %v1463 = vadd.f32 %v1276, %v1429
    %v1464 = vadd.f32 %v1278, %v1433
    %v1465 = vadd.f32 %v1280, %v1437
    %v1466 = vadd.f32 %v1282, %v1441
    %v1467 = vadd.f32 %v1284, %v1445
    %v1468 = vadd.f32 %v1286, %v1449
    %v1469 = vadd.f32 %v1288, %v1453
    %v1470 = vsub.f32 0.0, %v1083
    %v1471 = vsub.f32 0.0, %v1084
    %v1472 = vsub.f32 0.0, %v1085
    %v1473 = vsub.f32 0.0, %v1086
    %v1474 = vsub.f32 0.0, %v1087
    %v1475 = vsub.f32 0.0, %v1088
    %v1476 = vsub.f32 0.0, %v1089
    %v1477 = vsub.f32 0.0, %v1090
    %v1478 = vadd.f32 %v1470, %v1257
    %v1479 = vadd.f32 %v1471, %v1258
    %v1480 = vadd.f32 %v1472, %v1259
    %v1481 = vadd.f32 %v1473, %v1260
    %v1482 = vadd.f32 %v1474, %v1261
    %v1483 = vadd.f32 %v1475, %v1262
    %v1484 = vadd.f32 %v1476, %v1263
    %v1485 = vadd.f32 %v1477, %v1264
    %v1486 = vlog2.pop %v1462
    %v1487 = vmul.f32 %v1486, 0.6931472
    %v1488 = vlog2.pop %v1463
    %v1489 = vmul.f32 %v1488, 0.6931472
    %v1490 = vlog2.pop %v1464
    %v1491 = vmul.f32 %v1490, 0.6931472
    %v1492 = vlog2.pop %v1465
    %v1493 = vmul.f32 %v1492, 0.6931472
    %v1494 = vlog2.pop %v1466
    %v1495 = vmul.f32 %v1494, 0.6931472
    %v1496 = vlog2.pop %v1467
    %v1497 = vmul.f32 %v1496, 0.6931472
    %v1498 = vlog2.pop %v1468
    %v1499 = vmul.f32 %v1498, 0.6931472
    %v1500 = vlog2.pop %v1469
    %v1501 = vmul.f32 %v1500, 0.6931472
    %v1502 = vadd.f32 %v1478, %v1487
    %v1503 = vadd.f32 %v1479, %v1489
    %v1504 = vadd.f32 %v1480, %v1491
    %v1505 = vadd.f32 %v1481, %v1493
    %v1506 = vadd.f32 %v1482, %v1495
    %v1507 = vadd.f32 %v1483, %v1497
    %v1508 = vadd.f32 %v1484, %v1499
    %v1509 = vadd.f32 %v1485, %v1501
    %v1510 = vmul.f32 %v49, %v660
    %vm1511 = vcmask 7168
    %v1512 = vsel %vm1511, %v1510, 0.0
    %1513 = vadd.xlane.f32.xlu0 %v1512
    %v1514 = vpop.xlane.xlu0 %1513
    %v1515 = vrot.slane %v1514, 4
    %v1516 = vadd.f32 %v1514, %v1515
    %v1517 = vrot.slane %v1516, 2
    %v1518 = vadd.f32 %v1516, %v1517
    %v1519 = vrot.slane %v1518, 1
    %v1520 = vadd.f32 %v1518, %v1519
    %s1521 = vtos %v1520
    %v1522 = vmul.f32 %v49, %v859
    %v1523 = vsel %vm1511, %v1522, 0.0
    %1524 = vadd.xlane.f32.xlu0 %v1523
    %v1525 = vpop.xlane.xlu0 %1524
    %v1526 = vrot.slane %v1525, 4
    %v1527 = vadd.f32 %v1525, %v1526
    %v1528 = vrot.slane %v1527, 2
    %v1529 = vadd.f32 %v1527, %v1528
    %v1530 = vrot.slane %v1529, 1
    %v1531 = vadd.f32 %v1529, %v1530
    %s1532 = vtos %v1531
    %v1533 = vmul.f32 %v49, %v928
    %v1534 = vsel %vm1511, %v1533, 0.0
    %1535 = vadd.xlane.f32.xlu0 %v1534
    %v1536 = vpop.xlane.xlu0 %1535
    %v1537 = vrot.slane %v1536, 4
    %v1538 = vadd.f32 %v1536, %v1537
    %v1539 = vrot.slane %v1538, 2
    %v1540 = vadd.f32 %v1538, %v1539
    %v1541 = vrot.slane %v1540, 1
    %v1542 = vadd.f32 %v1540, %v1541
    %s1543 = vtos %v1542
    %v1552 = vrot.slane %v1503, 7
    %v1553 = vsel %vm623, %v1552, %v1502
    %v1554 = vrot.slane %v1504, 6
    %v1555 = vsel %vm625, %v1554, %v1553
    %v1556 = vrot.slane %v1505, 5
    %v1557 = vsel %vm627, %v1556, %v1555
    %v1558 = vrot.slane %v1506, 4
    %v1559 = vsel %vm629, %v1558, %v1557
    %v1560 = vrot.slane %v1507, 3
    %v1561 = vsel %vm631, %v1560, %v1559
    %v1562 = vrot.slane %v1508, 2
    %v1563 = vsel %vm633, %v1562, %v1561
    %v1564 = vrot.slane %v1509, 1
    %v1565 = vsel %vm635, %v1564, %v1563
    %v1567 = vmul.f32 %v49, %v1565
    %v1568 = vsel %vm1511, %v1567, 0.0
    %1569 = vadd.xlane.f32.xlu0 %v1568
    %v1570 = vpop.xlane.xlu0 %1569
    %v1571 = vrot.slane %v1570, 4
    %v1572 = vadd.f32 %v1570, %v1571
    %v1573 = vrot.slane %v1572, 2
    %v1574 = vadd.f32 %v1572, %v1573
    %v1575 = vrot.slane %v1574, 1
    %v1576 = vadd.f32 %v1574, %v1575
    %s1577 = vtos %v1576
    %v1578 = vsel %vm1511, %v49, 0.0
    %1579 = vadd.xlane.f32.xlu0 %v1578
    %v1580 = vpop.xlane.xlu0 %1579
    %v1581 = vrot.slane %v1580, 4
    %v1582 = vadd.f32 %v1580, %v1581
    %v1583 = vrot.slane %v1582, 2
    %v1584 = vadd.f32 %v1582, %v1583
    %v1585 = vrot.slane %v1584, 1
    %v1586 = vadd.f32 %v1584, %v1585
    %s1587 = vtos %v1586
    %v1588 = vstv %s1521
    %v1589 = vsel %vm582, %v1588, 0.0
    %vm1590 = vcmp.eq.s32.totalorder %v581, 1
    %v1591 = vstv %s1532
    %v1592 = vsel %vm1590, %v1591, 0.0
    %v1593 = vadd.f32 %v1589, %v1592
    %vm1594 = vcmp.eq.s32.totalorder %v581, 2
    %v1595 = vstv %s1543
    %v1596 = vsel %vm1594, %v1595, 0.0
    %v1597 = vadd.f32 %v1593, %v1596
    %vm1598 = vcmp.eq.s32.totalorder %v581, 3
    %v1599 = vstv %s1577
    %v1600 = vsel %vm1598, %v1599, 0.0
    %v1601 = vadd.f32 %v1597, %v1600
    %vm1602 = vcmp.eq.s32.totalorder %v581, 4
    %v1603 = vstv %s1587
    %v1604 = vsel %vm1602, %v1603, 0.0
    %v1605 = vadd.f32 %v1601, %v1604
    %1606 = vst [vmem:[#allocation2] sm:$0xff] %v1605
    // Predicated region
    $region42: #{tpu_custom_call.1} parent=1 // pred_check
      _
    $region43: #{tpu_custom_call.1} parent=1 // pred_check_branch
      %1608 = sbr.rel (0) target = $region45
    $region44: #{tpu_custom_call.1} parent=1 // pred_region
      %s1610 = ssub.s32 128, 128
      %1611 = vsyncadd [#allocation3], %s1610
      %s1613 = sshll.u32 [#allocation2], 4
      %s1614 = int_to_ptr.vmem [resolvable:$true] %s1613
      %1616 = dma.vmem_to_hbm [thread:$0]  %s1614, 128, %s10, [#allocation3]
    $region45: #{tpu_custom_call.1} parent=1 // pred_fallthru
      _
    // Predicated region
    $region46: #{tpu_custom_call.1} parent=1 // pred_check
      _
    $region47: #{tpu_custom_call.1} parent=1 // pred_check_branch
      %1618 = sbr.rel (0) target = $region49
    $region48: #{tpu_custom_call.1} parent=1 // pred_region
      %1619 = dma.done [#allocation3], 128
    $region49: #{tpu_custom_call.1} parent=1 // pred_fallthru
      _
    %1620 = vsyncpa [#allocation3], 1

</llo_original>
